<compile_context>
chip_gen: v5e
topology: v5e:2x2
jax: 0.10.0
libtpu: 0.0.40
codegen_flags: <defaults>
</compile_context>

<pallas_src>
import functools

import jax
import jax.numpy as jnp
from jax.experimental import pallas as pl
from jax.experimental.pallas import tpu as pltpu


# ----------------------------------------------------------------------------
# Config (stand-in sizes implied by the module)
# ----------------------------------------------------------------------------

VOCAB = 64        # tokenizer vocab (stand-in)
D_TXT = 32        # text-encoder hidden dim
C_LAT = 4         # VAE / UNet latent channels
D_ATTN = 32       # UNet cross-attention dim
PATCH = 4         # spatial downsample factor of the 'VAE' / 'pose_net'

MAX_TOKEN_TILE = 2048              # tokens per tile on the lane axis (mult. of 512)
VMEM_LIMIT = 48 * 1024 * 1024      # <= 48 MiB: safe on v7x (64 MiB/TC) and v5e/v6e


def _round_up(x, m):
    return ((x + m - 1) // m) * m


def _choose_token_tile(t, max_tile=MAX_TOKEN_TILE):
    """Lane-dense token tile (always a multiple of 128) + padded token count."""
    t128 = _round_up(t, 128)
    if t128 <= max_tile:
        return t128, t128
    # prefer the largest 512-multiple divisor of the padded count, else 128-multiple
    for step in (512, 128):
        tm = (max_tile // step) * step
        while tm >= step:
            if t128 % tm == 0:
                return tm, t128
            tm -= step
    return max_tile, _round_up(t, max_tile)


# ----------------------------------------------------------------------------
# Kernel 1: "preamble" — text encoder + folded attn proj + timestep MLP +
#           VAE-conv folded with the app_net image branch (all KB-sized)
# ----------------------------------------------------------------------------

def _preamble_kernel(tok_ref, lng_ref, lnb_ref, wt_ref, bt_ref, wattn_ref, battn_ref,
                     temb_ref, wt1_ref, bt1_ref, wt2_ref, bt2_ref,
                     patch_ref, wg_ref, bg_ref,
                     attn_ref, tch_ref, g_ref, *, eps):
    f32 = jnp.float32

    # --- CLIP text encoder stand-in: LN -> GELU linear ---
    # TODO(synk): string tokenizer + full CLIP transformer replaced by an
    # embedding lookup (JAX gather) + LN + GELU-linear stand-in.
    x = tok_ref[...].astype(f32)
    mu = jnp.mean(x, axis=-1, keepdims=True)
    var = jnp.mean(jnp.square(x - mu), axis=-1, keepdims=True)
    xn = (x - mu) * jax.lax.rsqrt(var + eps)
    xn = xn * lng_ref[...] + lnb_ref[...]
    # TODO(synk): PyTorch default GELU is exact erf; tanh approximation used here.
    txt = jnp.dot(xn, wt_ref[...], preferred_element_type=f32) + bt_ref[...]
    txt = jax.nn.gelu(txt, approximate=True)
    # folded attention projections: columns = [scale*Wk*Wq^T | scale*Wk*bq | Wv*Wo]
    attn_ref[...] = (jnp.dot(txt, wattn_ref[...], preferred_element_type=f32)
                     + battn_ref[...]).astype(attn_ref.dtype)

    # --- timestep MLP (SiLU) -> per-batch channel bias ---
    t = temb_ref[...].astype(f32)
    t = jnp.dot(t, wt1_ref[...], preferred_element_type=f32) + bt1_ref[...]
    t = t * jax.nn.sigmoid(t)
    t = jnp.dot(t, wt2_ref[...], preferred_element_type=f32) + bt2_ref[...]
    tch_ref[...] = t.astype(tch_ref.dtype)

    # --- VAE encoder (x0.18215) folded with app_net image branch: g = [gd|gm] ---
    # TODO(synk): latent_dist.sample() replaced by the distribution mean.
    p = patch_ref[...].astype(f32)
    g_ref[...] = (jnp.dot(p, wg_ref[...], preferred_element_type=f32)
                  + bg_ref[...]).astype(g_ref.dtype)


def preamble(tok, ln_g, ln_b, wt, bt, w_attn, b_attn, temb, wt1, bt1, wt2, bt2,
             patches, w_g, b_g):
    """One pallas_call for all the tiny (KB-sized) non-token-stream compute."""
    n_txt = tok.shape[0]
    n_attn = w_attn.shape[1]
    b = temb.shape[0]
    c = wt2.shape[1]
    n_pat = patches.shape[0]
    n_g = w_g.shape[1]

    inputs = [tok,
              ln_g.reshape(1, -1), ln_b.reshape(1, -1),
              wt, bt.reshape(1, -1),
              w_attn, b_attn.reshape(1, -1),
              temb, wt1, bt1.reshape(1, -1), wt2, bt2.reshape(1, -1),
              patches, w_g, b_g.reshape(1, -1)]
    in_specs = [pl.BlockSpec(a.shape, lambda i: (0, 0)) for a in inputs]

    out_shape = (jax.ShapeDtypeStruct((n_txt, n_attn), jnp.float32),  # folded attn
                 jax.ShapeDtypeStruct((b, c), jnp.float32),           # t_ch
                 jax.ShapeDtypeStruct((n_pat, n_g), jnp.float32))     # [gd|gm]
    out_specs = (pl.BlockSpec((n_txt, n_attn), lambda i: (0, 0)),
                 pl.BlockSpec((b, c), lambda i: (0, 0)),
                 pl.BlockSpec((n_pat, n_g), lambda i: (0, 0)))

    return pl.pallas_call(
        functools.partial(_preamble_kernel, eps=1e-5),
        out_shape=out_shape,
        grid=(1,),
        in_specs=in_specs,
        out_specs=out_specs,
        compiler_params=pltpu.CompilerParams(
            dimension_semantics=("arbitrary",),
            vmem_limit_bytes=VMEM_LIMIT),
    )(*inputs)


# ----------------------------------------------------------------------------
# Kernel 2: fused token-stream tail (tokens on the lane axis)
# ----------------------------------------------------------------------------

def _tail_kernel(x_ref, pose_ref, tch_ref, gd_ref, gm_ref, kp_ref, bqp_ref, wop_ref,
                 wp_ref, bp_ref, wdx_ref, wmx_ref, bo_ref, wout_ref, bout_ref,
                 o_ref, *, lamda_pose, hw):
    f32 = jnp.float32
    x = x_ref[...].astype(f32)                                     # (C, TM) f32 stream
    tm = x.shape[-1]

    # --- pose_net: patchified 1x1 conv + SiLU (bf16 stream, f32 accumulate) ---
    pe = (jnp.dot(wp_ref[...], pose_ref[...].astype(f32),
                  preferred_element_type=f32) + bp_ref[...])
    pe = pe * jax.nn.sigmoid(pe)                                   # (C, TM)

    # --- x_noisy += lamda_pose * pose_emb ---
    xn = x + lamda_pose * pe

    # --- spatial -> token one-hot broadcast (token order is (frame, spatial));
    #     replaces the F-times inflated img_rep HBM materialization ---
    start = pl.program_id(1) * tm
    sp = (start + jax.lax.broadcasted_iota(jnp.int32, (hw, tm), 1)) % hw
    row = jax.lax.broadcasted_iota(jnp.int32, (hw, tm), 0)
    bmat = (sp == row).astype(f32)                                 # (HW, TM)

    # --- app_net: image branch precomputed per spatial token (gd/gm),
    #     x branch computed here; down/mid kept separate (no sublane split) ---
    down = (jnp.dot(gd_ref[...], bmat, preferred_element_type=f32)
            + jnp.dot(wdx_ref[...], x, preferred_element_type=f32))
    down = down * jax.nn.sigmoid(down)                             # (C, TM)
    mid = (jnp.dot(gm_ref[...], bmat, preferred_element_type=f32)
           + jnp.dot(wmx_ref[...], x, preferred_element_type=f32))
    mid = mid * jax.nn.sigmoid(mid)                                # (C, TM)

    # --- SpaceTimeUnet trunk: timestep conditioning + down residual ---
    h = xn + tch_ref[...] + down                                   # (C,1) broadcast

    # --- cross-attention with q / out projections folded out of the loop ---
    # TODO(synk): no padding mask over prompt tokens (fixed L stand-in).
    s = jnp.dot(kp_ref[...], h, preferred_element_type=f32) + bqp_ref[...]   # (L, TM)
    m = jnp.max(s, axis=0, keepdims=True)
    p = jnp.exp(s - m)
    denom = jnp.sum(p, axis=0, keepdims=True)
    ao = (jnp.dot(wop_ref[...], p, preferred_element_type=f32) / denom
          + bo_ref[...])                                           # (C, TM)

    # --- mid residual + output projection ---
    h = h + ao + mid
    pred = jnp.dot(wout_ref[...], h, preferred_element_type=f32) + bout_ref[...]
    o_ref[...] = pred.astype(o_ref.dtype)                          # lane-dense store


def fused_tail(x_bct, pose_bkt, tch_bc1, gd_bch, gm_bch, kp_blc, bqp_bl1, wop_bcl,
               wp, bp, wdx, wmx, bo, wout, bout, *, lamda_pose, hw):
    B, C, T = x_bct.shape
    KP = pose_bkt.shape[1]
    L = kp_blc.shape[1]

    TM, T_pad = _choose_token_tile(T)
    if T_pad != T:
        pad = ((0, 0), (0, 0), (0, T_pad - T))
        x_bct = jnp.pad(x_bct, pad)
        pose_bkt = jnp.pad(pose_bkt, pad)

    def tile(d):          # token-tiled inputs/outputs: (B, d, T_pad) -> (d, TM)
        return pl.BlockSpec((None, d, TM), lambda b, i: (b, 0, i))

    def per_batch(r, cc):  # small per-batch operands: (B, r, cc) -> (r, cc)
        return pl.BlockSpec((None, r, cc), lambda b, i: (b, 0, 0))

    def whole(arr):       # tiny weights / biases, whole-array in VMEM
        return pl.BlockSpec(arr.shape, lambda b, i: (0, 0))

    in_specs = [tile(C), tile(KP),
                per_batch(C, 1), per_batch(C, hw), per_batch(C, hw),
                per_batch(L, C), per_batch(L, 1), per_batch(C, L),
                whole(wp), whole(bp), whole(wdx), whole(wmx),
                whole(bo), whole(wout), whole(bout)]

    out = pl.pallas_call(
        functools.partial(_tail_kernel, lamda_pose=lamda_pose, hw=hw),
        out_shape=jax.ShapeDtypeStruct((B, C, T_pad), x_bct.dtype),
        grid=(B, T_pad // TM),
        in_specs=in_specs,
        out_specs=tile(C),
        compiler_params=pltpu.CompilerParams(
            dimension_semantics=("parallel", "parallel"),
            vmem_limit_bytes=VMEM_LIMIT),
    )(x_bct, pose_bkt, tch_bc1, gd_bch, gm_bch, kp_blc, bqp_bl1, wop_bcl,
      wp, bp, wdx, wmx, bo, wout, bout)

    return out[:, :, :T] if T_pad != T else out


# ----------------------------------------------------------------------------
# Glue: layout conversions (plain JAX, run once per call)
# ----------------------------------------------------------------------------

def patchify_nchw(img, P):
    """(B, C, H, W) -> (B*(H/P)*(W/P), C*P*P) — im2col for a stride-P 'VAE' conv."""
    B, C, H, W = img.shape
    x = img.reshape(B, C, H // P, P, W // P, P)
    x = jnp.transpose(x, (0, 2, 4, 1, 3, 5))
    return x.reshape(B * (H // P) * (W // P), C * P * P)


def patchify_ncfhw_transposed(vid, P):
    """(B, C, F, H, W) -> (B, C*P*P, F*(H/P)*(W/P)) — im2col with tokens on lanes."""
    # TODO(synk): the patchify transpose itself still round-trips HBM once;
    # emitting it in bf16 (done by the caller) halves that traffic.
    B, C, F, H, W = vid.shape
    hl, wl = H // P, W // P
    x = vid.reshape(B, C, F, hl, P, wl, P)
    x = jnp.transpose(x, (0, 1, 4, 6, 2, 3, 5))        # (B, C, P, P, F, hl, wl)
    return x.reshape(B, C * P * P, F * hl * wl)


def timestep_embedding(t, dim):
    half = dim // 2
    freqs = jnp.exp(-jnp.log(10000.0) * jnp.arange(half, dtype=jnp.float32) / half)
    args = t.astype(jnp.float32)[:, None] * freqs[None, :]
    return jnp.concatenate([jnp.sin(args), jnp.cos(args)], axis=-1)


# ----------------------------------------------------------------------------
# Parameters (deterministic synthetic init; shapes implied by the module)
# ----------------------------------------------------------------------------

def init_params(key):
    keys = iter(jax.random.split(key, 24))

    def w(shape, scale=0.05):
        return jax.random.normal(next(keys), shape, jnp.float32) * scale

    def z(shape):
        return jnp.zeros(shape, jnp.float32)

    kp = 3 * PATCH * PATCH
    return {
        "text": {  # CLIPTextModel stand-in: embed -> LN -> GELU-linear
            "emb": w((VOCAB, D_TXT), 0.02),
            "ln_g": jnp.ones((D_TXT,), jnp.float32),
            "ln_b": z((D_TXT,)),
            "w": w((D_TXT, D_TXT)),
            "b": z((D_TXT,)),
        },
        "vae": {"w": w((kp, C_LAT)), "b": z((C_LAT,))},           # patchify-conv encoder
        "app": {                                                   # AppConditioningEmbedding
            "wd": w((2 * C_LAT, C_LAT)), "bd": z((C_LAT,)),
            "wm": w((2 * C_LAT, C_LAT)), "bm": z((C_LAT,)),
        },
        "pose": {"w": w((kp, C_LAT)), "b": z((C_LAT,))},           # PoseConditioningEmbedding
        "unet": {                                                  # SpaceTimeUnet stand-in
            "wt1": w((D_TXT, D_TXT)), "bt1": z((D_TXT,)),
            "wt2": w((D_TXT, C_LAT)), "bt2": z((C_LAT,)),
            "wq": w((C_LAT, D_ATTN)), "bq": z((D_ATTN,)),
            "wk": w((D_TXT, D_ATTN)), "bk": z((D_ATTN,)),
            "wv": w((D_TXT, D_ATTN)), "bv": z((D_ATTN,)),
            "wo": w((D_ATTN, C_LAT)), "bo": z((C_LAT,)),
            "wout": w((C_LAT, C_LAT)), "bout": z((C_LAT,)),
        },
    }


# ----------------------------------------------------------------------------
# Forward pass (mirrors MotionControlPipeline.forward)
# ----------------------------------------------------------------------------

def motion_control_forward(params, x_noisy, prompt_ids, image, pose, timestep,
                           lamda_pose=0.03):
    B, C, F, Hl, Wl = x_noisy.shape
    L = prompt_ids.shape[1]
    T = F * Hl * Wl
    HW = Hl * Wl
    Da = D_ATTN
    scale = 1.0 / float(Da) ** 0.5

    p_text, p_vae = params["text"], params["vae"]
    p_app, p_pose, p_unet = params["app"], params["pose"], params["unet"]

    # --- glue: gathers / patchify / sinusoidal timestep embedding ---
    tok = jnp.take(p_text["emb"], prompt_ids, axis=0).reshape(B * L, D_TXT)
    temb = timestep_embedding(timestep, D_TXT)                     # (B, Dt)
    img_patches = patchify_nchw(image, PATCH)                      # (B*HW, 3*P*P)
    # pose stream in bf16: ~85% of tail input bytes (f32 accumulate in-kernel)
    pose_t = patchify_ncfhw_transposed(pose, PATCH).astype(jnp.bfloat16)  # (B, KP, T)

    # --- fold attention q / output projections (exact algebra, tiny matmuls) ---
    wq, bq = p_unet["wq"], p_unet["bq"]
    wk, bk = p_unet["wk"], p_unet["bk"]
    wv, bv = p_unet["wv"], p_unet["bv"]
    wo, bo = p_unet["wo"], p_unet["bo"]
    wkp = scale * (wk @ wq.T)                                      # (Dt, C)
    bkp = scale * (bk @ wq.T)                                      # (C,)
    wbq = scale * (wk @ bq)                                        # (Dt,)
    bbq = scale * jnp.dot(bk, bq)                                  # scalar
    wvo = wv @ wo                                                  # (Dt, C)
    bvo = bv @ wo                                                  # (C,)
    w_attn = jnp.concatenate([wkp, wbq[:, None], wvo], axis=1)     # (Dt, 2C+1)
    b_attn = jnp.concatenate([bkp, bbq[None], bvo], axis=0)        # (2C+1,)

    # --- fold VAE conv (x0.18215) with the app_net image branch (exact) ---
    wd, bd = p_app["wd"], p_app["bd"]                              # (2C, C), (C,)
    wm, bm = p_app["wm"], p_app["bm"]
    wvae, bvae = p_vae["w"], p_vae["b"]
    w_gd = 0.18215 * (wvae @ wd[:C]); b_gd = 0.18215 * (bvae @ wd[:C]) + bd
    w_gm = 0.18215 * (wvae @ wm[:C]); b_gm = 0.18215 * (bvae @ wm[:C]) + bm
    w_g = jnp.concatenate([w_gd, w_gm], axis=1)                    # (3*P*P, 2C)
    b_g = jnp.concatenate([b_gd, b_gm], axis=0)                    # (2C,)

    # --- kernel 1: text encoder + folded attn proj + timestep MLP + VAE/app-img ---
    attn_pre, t_ch, g_flat = preamble(
        tok, p_text["ln_g"], p_text["ln_b"], p_text["w"], p_text["b"],
        w_attn, b_attn, temb,
        p_unet["wt1"], p_unet["bt1"], p_unet["wt2"], p_unet["bt2"],
        img_patches, w_g, b_g)

    ap = attn_pre.reshape(B, L, 2 * C + 1)
    kp = ap[:, :, :C]                                              # (B, L, C)
    bqp = ap[:, :, C:C + 1]                                        # (B, L, 1)
    wop = jnp.transpose(ap[:, :, C + 1:], (0, 2, 1))               # (B, C, L)
    t_ch = t_ch.reshape(B, C, 1)
    g = jnp.transpose(g_flat.reshape(B, HW, 2 * C), (0, 2, 1))     # (B, 2C, HW)
    gd, gm = g[:, :C], g[:, C:]                                    # (B, C, HW) each

    # pre-transposed ("tokens on lanes") weights for the fused tail
    wp_t = p_pose["w"].T                                           # (C, KP)
    bp = p_pose["b"].reshape(C, 1)
    wdx_t = wd[C:].T                                               # (C, C) x-branch
    wmx_t = wm[C:].T                                               # (C, C)
    bo_attn = bo.reshape(C, 1)
    wout_t = p_unet["wout"].T                                      # (C, C)
    bout = p_unet["bout"].reshape(C, 1)

    # x_noisy in its native (B, C, F, H, W) layout is already channels-major /
    # tokens-minor: a plain reshape gives the lane-dense (B, C, T) view (f32,
    # no extra HBM pass).
    x_bct = x_noisy.reshape(B, C, T)

    # --- kernel 2: fused pose_net + app_net + residual update + UNet tail ---
    pred = fused_tail(x_bct, pose_t, t_ch, gd, gm, kp, bqp, wop,
                      wp_t, bp, wdx_t, wmx_t, bo_attn, wout_t, bout,
                      lamda_pose=lamda_pose, hw=HW)

    return pred.reshape(B, C, F, Hl, Wl)


# ----------------------------------------------------------------------------
# Main
# ----------------------------------------------------------------------------

if __name__ == "__main__":
    key = jax.random.PRNGKey(0)
    kparam, kx, kid, kim, kpose = jax.random.split(key, 5)

    B, F, Himg, Wimg = 2, 8, 16, 16
    Hl, Wl = Himg // PATCH, Wimg // PATCH
    L = 8

    params = init_params(kparam)
    x_noisy = jax.random.normal(kx, (B, C_LAT, F, Hl, Wl), jnp.float32)
    prompt_ids = jax.random.randint(kid, (B, L), 0, VOCAB, dtype=jnp.int32)
    image = jax.random.normal(kim, (B, 3, Himg, Wimg), jnp.float32)
    pose = jax.random.normal(kpose, (B, 3, F, Himg, Wimg), jnp.float32)
    timestep = jnp.array([10, 500], dtype=jnp.int32)

    fwd = jax.jit(functools.partial(motion_control_forward, lamda_pose=0.03))
    pred = fwd(params, x_noisy, prompt_ids, image, pose, timestep)
    pred = jax.block_until_ready(pred)

    assert pred.shape == x_noisy.shape and pred.dtype == jnp.float32
    assert bool(jnp.all(jnp.isfinite(pred)))
    print("KERNEL_OK")
</pallas_src>

<mosaic_0001>
module attributes {stable_mosaic.version = 11 : i64} {
  func.func @_preamble_kernel(%arg0: i32, %arg1: memref<16x32xf32, #tpu.memory_space<vmem>>, %arg2: memref<1x32xf32, #tpu.memory_space<vmem>>, %arg3: memref<1x32xf32, #tpu.memory_space<vmem>>, %arg4: memref<32x32xf32, #tpu.memory_space<vmem>>, %arg5: memref<1x32xf32, #tpu.memory_space<vmem>>, %arg6: memref<32x9xf32, #tpu.memory_space<vmem>>, %arg7: memref<1x9xf32, #tpu.memory_space<vmem>>, %arg8: memref<2x32xf32, #tpu.memory_space<vmem>>, %arg9: memref<32x32xf32, #tpu.memory_space<vmem>>, %arg10: memref<1x32xf32, #tpu.memory_space<vmem>>, %arg11: memref<32x4xf32, #tpu.memory_space<vmem>>, %arg12: memref<1x4xf32, #tpu.memory_space<vmem>>, %arg13: memref<32x48xf32, #tpu.memory_space<vmem>>, %arg14: memref<48x8xf32, #tpu.memory_space<vmem>>, %arg15: memref<1x8xf32, #tpu.memory_space<vmem>>, %arg16: memref<16x9xf32, #tpu.memory_space<vmem>>, %arg17: memref<2x4xf32, #tpu.memory_space<vmem>>, %arg18: memref<32x8xf32, #tpu.memory_space<vmem>>) attributes {dimension_semantics = [#tpu.dimension_semantics<arbitrary>], iteration_bounds = array<i64: 1>, scalar_prefetch = 0 : i64, scratch_operands = 0 : i64, tpu.core_type = #tpu.core_type<tc>, window_params = [{pipeline_mode = #tpu.pipeline_mode<synchronous>, transform_indices = @transform_0, window_bounds = array<i64: 16, 32>}, {pipeline_mode = #tpu.pipeline_mode<synchronous>, transform_indices = @transform_1, window_bounds = array<i64: 1, 32>}, {pipeline_mode = #tpu.pipeline_mode<synchronous>, transform_indices = @transform_2, window_bounds = array<i64: 1, 32>}, {pipeline_mode = #tpu.pipeline_mode<synchronous>, transform_indices = @transform_3, window_bounds = array<i64: 32, 32>}, {pipeline_mode = #tpu.pipeline_mode<synchronous>, transform_indices = @transform_4, window_bounds = array<i64: 1, 32>}, {pipeline_mode = #tpu.pipeline_mode<synchronous>, transform_indices = @transform_5, window_bounds = array<i64: 32, 9>}, {pipeline_mode = #tpu.pipeline_mode<synchronous>, transform_indices = @transform_6, window_bounds = array<i64: 1, 9>}, {pipeline_mode = #tpu.pipeline_mode<synchronous>, transform_indices = @transform_7, window_bounds = array<i64: 2, 32>}, {pipeline_mode = #tpu.pipeline_mode<synchronous>, transform_indices = @transform_8, window_bounds = array<i64: 32, 32>}, {pipeline_mode = #tpu.pipeline_mode<synchronous>, transform_indices = @transform_9, window_bounds = array<i64: 1, 32>}, {pipeline_mode = #tpu.pipeline_mode<synchronous>, transform_indices = @transform_10, window_bounds = array<i64: 32, 4>}, {pipeline_mode = #tpu.pipeline_mode<synchronous>, transform_indices = @transform_11, window_bounds = array<i64: 1, 4>}, {pipeline_mode = #tpu.pipeline_mode<synchronous>, transform_indices = @transform_12, window_bounds = array<i64: 32, 48>}, {pipeline_mode = #tpu.pipeline_mode<synchronous>, transform_indices = @transform_13, window_bounds = array<i64: 48, 8>}, {pipeline_mode = #tpu.pipeline_mode<synchronous>, transform_indices = @transform_14, window_bounds = array<i64: 1, 8>}, {pipeline_mode = #tpu.pipeline_mode<synchronous>, transform_indices = @transform_15, window_bounds = array<i64: 16, 9>}, {pipeline_mode = #tpu.pipeline_mode<synchronous>, transform_indices = @transform_16, window_bounds = array<i64: 2, 4>}, {pipeline_mode = #tpu.pipeline_mode<synchronous>, transform_indices = @transform_17, window_bounds = array<i64: 32, 8>}]} {
    %c0 = arith.constant 0 : index
    %c0_0 = arith.constant 0 : index
    %0 = vector.load %arg1[%c0, %c0_0] : memref<16x32xf32, #tpu.memory_space<vmem>>, vector<16x32xf32>
    %cst = arith.constant dense<0.000000e+00> : vector<16xf32>
    %1 = vector.multi_reduction <add>, %0, %cst [1] : vector<16x32xf32> to vector<16xf32>
    %2 = vector.shape_cast %1 : vector<16xf32> to vector<16x1xf32>
    %cst_1 = arith.constant 3.200000e+01 : f32
    %3 = vector.broadcast %cst_1 : f32 to vector<16x1xf32>
    %4 = arith.divf %2, %3 : vector<16x1xf32>
    %5 = vector.broadcast %4 : vector<16x1xf32> to vector<16x32xf32>
    %6 = arith.subf %0, %5 : vector<16x32xf32>
    %7 = arith.mulf %6, %6 : vector<16x32xf32>
    %cst_2 = arith.constant dense<0.000000e+00> : vector<16xf32>
    %8 = vector.multi_reduction <add>, %7, %cst_2 [1] : vector<16x32xf32> to vector<16xf32>
    %9 = vector.shape_cast %8 : vector<16xf32> to vector<16x1xf32>
    %cst_3 = arith.constant 3.200000e+01 : f32
    %10 = vector.broadcast %cst_3 : f32 to vector<16x1xf32>
    %11 = arith.divf %9, %10 : vector<16x1xf32>
    %12 = vector.broadcast %4 : vector<16x1xf32> to vector<16x32xf32>
    %13 = arith.subf %0, %12 : vector<16x32xf32>
    %cst_4 = arith.constant 9.99999974E-6 : f32
    %14 = vector.broadcast %cst_4 : f32 to vector<16x1xf32>
    %15 = arith.addf %11, %14 : vector<16x1xf32>
    %16 = math.rsqrt %15 : vector<16x1xf32>
    %17 = vector.broadcast %16 : vector<16x1xf32> to vector<16x32xf32>
    %18 = arith.mulf %13, %17 : vector<16x32xf32>
    %c0_5 = arith.constant 0 : index
    %c0_6 = arith.constant 0 : index
    %19 = vector.load %arg2[%c0_5, %c0_6] : memref<1x32xf32, #tpu.memory_space<vmem>>, vector<1x32xf32>
    %20 = vector.broadcast %19 : vector<1x32xf32> to vector<16x32xf32>
    %21 = arith.mulf %18, %20 : vector<16x32xf32>
    %c0_7 = arith.constant 0 : index
    %c0_8 = arith.constant 0 : index
    %22 = vector.load %arg3[%c0_7, %c0_8] : memref<1x32xf32, #tpu.memory_space<vmem>>, vector<1x32xf32>
    %23 = vector.broadcast %22 : vector<1x32xf32> to vector<16x32xf32>
    %24 = arith.addf %21, %23 : vector<16x32xf32>
    %c0_9 = arith.constant 0 : index
    %c0_10 = arith.constant 0 : index
    %25 = vector.load %arg4[%c0_9, %c0_10] : memref<32x32xf32, #tpu.memory_space<vmem>>, vector<32x32xf32>
    %cst_11 = arith.constant dense<0.000000e+00> : vector<16x32xf32>
    %26 = tpu.matmul %24, %25, %cst_11 {dimension_numbers = #tpu.dot_dimension_numbers<[1], [0], [0], [1], [0, 0, 1, 1], [], []>} : vector<16x32xf32>, vector<32x32xf32>, vector<16x32xf32> -> vector<16x32xf32>
    %c0_12 = arith.constant 0 : index
    %c0_13 = arith.constant 0 : index
    %27 = vector.load %arg5[%c0_12, %c0_13] : memref<1x32xf32, #tpu.memory_space<vmem>>, vector<1x32xf32>
    %28 = vector.broadcast %27 : vector<1x32xf32> to vector<16x32xf32>
    %29 = arith.addf %26, %28 : vector<16x32xf32>
    %30 = arith.mulf %29, %29 : vector<16x32xf32>
    %31 = arith.mulf %29, %30 : vector<16x32xf32>
    %cst_14 = arith.constant 4.471500e-02 : f32
    %32 = vector.broadcast %cst_14 : f32 to vector<16x32xf32>
    %33 = arith.mulf %32, %31 : vector<16x32xf32>
    %34 = arith.addf %29, %33 : vector<16x32xf32>
    %cst_15 = arith.constant 0.797884583 : f32
    %35 = vector.broadcast %cst_15 : f32 to vector<16x32xf32>
    %36 = arith.mulf %35, %34 : vector<16x32xf32>
    %37 = math.tanh %36 : vector<16x32xf32>
    %cst_16 = arith.constant 1.000000e+00 : f32
    %38 = vector.broadcast %cst_16 : f32 to vector<16x32xf32>
    %39 = arith.addf %38, %37 : vector<16x32xf32>
    %cst_17 = arith.constant 5.000000e-01 : f32
    %40 = vector.broadcast %cst_17 : f32 to vector<16x32xf32>
    %41 = arith.mulf %40, %39 : vector<16x32xf32>
    %42 = arith.mulf %29, %41 : vector<16x32xf32>
    %c0_18 = arith.constant 0 : index
    %c0_19 = arith.constant 0 : index
    %43 = vector.load %arg6[%c0_18, %c0_19] : memref<32x9xf32, #tpu.memory_space<vmem>>, vector<32x9xf32>
    %cst_20 = arith.constant dense<0.000000e+00> : vector<16x9xf32>
    %44 = tpu.matmul %42, %43, %cst_20 {dimension_numbers = #tpu.dot_dimension_numbers<[1], [0], [0], [1], [0, 0, 1, 1], [], []>} : vector<16x32xf32>, vector<32x9xf32>, vector<16x9xf32> -> vector<16x9xf32>
    %c0_21 = arith.constant 0 : index
    %c0_22 = arith.constant 0 : index
    %45 = vector.load %arg7[%c0_21, %c0_22] : memref<1x9xf32, #tpu.memory_space<vmem>>, vector<1x9xf32>
    %46 = vector.broadcast %45 : vector<1x9xf32> to vector<16x9xf32>
    %47 = arith.addf %44, %46 : vector<16x9xf32>
    %c0_23 = arith.constant 0 : index
    %c0_24 = arith.constant 0 : index
    %48 = vector.load %arg16[%c0_23, %c0_24] : memref<16x9xf32, #tpu.memory_space<vmem>>, vector<16x9xf32>
    tpu.vector_store %arg16[%c0_23, %c0_24], %47 {strides = array<i32>} : memref<16x9xf32, #tpu.memory_space<vmem>>, vector<16x9xf32>,
    %c0_25 = arith.constant 0 : index
    %c0_26 = arith.constant 0 : index
    %49 = vector.load %arg8[%c0_25, %c0_26] : memref<2x32xf32, #tpu.memory_space<vmem>>, vector<2x32xf32>
    %c0_27 = arith.constant 0 : index
    %c0_28 = arith.constant 0 : index
    %50 = vector.load %arg9[%c0_27, %c0_28] : memref<32x32xf32, #tpu.memory_space<vmem>>, vector<32x32xf32>
    %cst_29 = arith.constant dense<0.000000e+00> : vector<2x32xf32>
    %51 = tpu.matmul %49, %50, %cst_29 {dimension_numbers = #tpu.dot_dimension_numbers<[1], [0], [0], [1], [0, 0, 1, 1], [], []>} : vector<2x32xf32>, vector<32x32xf32>, vector<2x32xf32> -> vector<2x32xf32>
    %c0_30 = arith.constant 0 : index
    %c0_31 = arith.constant 0 : index
    %52 = vector.load %arg10[%c0_30, %c0_31] : memref<1x32xf32, #tpu.memory_space<vmem>>, vector<1x32xf32>
    %53 = vector.broadcast %52 : vector<1x32xf32> to vector<2x32xf32>
    %54 = arith.addf %51, %53 : vector<2x32xf32>
    %55 = arith.negf %54 : vector<2x32xf32>
    %56 = math.exp %55 : vector<2x32xf32>
    %cst_32 = arith.constant 1.000000e+00 : f32
    %57 = vector.broadcast %cst_32 : f32 to vector<2x32xf32>
    %58 = arith.addf %57, %56 : vector<2x32xf32>
    %59 = arith.divf %57, %58 : vector<2x32xf32>
    %60 = arith.mulf %54, %59 : vector<2x32xf32>
    %c0_33 = arith.constant 0 : index
    %c0_34 = arith.constant 0 : index
    %61 = vector.load %arg11[%c0_33, %c0_34] : memref<32x4xf32, #tpu.memory_space<vmem>>, vector<32x4xf32>
    %cst_35 = arith.constant dense<0.000000e+00> : vector<2x4xf32>
    %62 = tpu.matmul %60, %61, %cst_35 {dimension_numbers = #tpu.dot_dimension_numbers<[1], [0], [0], [1], [0, 0, 1, 1], [], []>} : vector<2x32xf32>, vector<32x4xf32>, vector<2x4xf32> -> vector<2x4xf32>
    %c0_36 = arith.constant 0 : index
    %c0_37 = arith.constant 0 : index
    %63 = vector.load %arg12[%c0_36, %c0_37] : memref<1x4xf32, #tpu.memory_space<vmem>>, vector<1x4xf32>
    %64 = vector.broadcast %63 : vector<1x4xf32> to vector<2x4xf32>
    %65 = arith.addf %62, %64 : vector<2x4xf32>
    %c0_38 = arith.constant 0 : index
    %c0_39 = arith.constant 0 : index
    %66 = vector.load %arg17[%c0_38, %c0_39] : memref<2x4xf32, #tpu.memory_space<vmem>>, vector<2x4xf32>
    tpu.vector_store %arg17[%c0_38, %c0_39], %65 {strides = array<i32>} : memref<2x4xf32, #tpu.memory_space<vmem>>, vector<2x4xf32>,
    %c0_40 = arith.constant 0 : index
    %c0_41 = arith.constant 0 : index
    %67 = vector.load %arg13[%c0_40, %c0_41] : memref<32x48xf32, #tpu.memory_space<vmem>>, vector<32x48xf32>
    %c0_42 = arith.constant 0 : index
    %c0_43 = arith.constant 0 : index
    %68 = vector.load %arg14[%c0_42, %c0_43] : memref<48x8xf32, #tpu.memory_space<vmem>>, vector<48x8xf32>
    %cst_44 = arith.constant dense<0.000000e+00> : vector<32x8xf32>
    %69 = tpu.matmul %67, %68, %cst_44 {dimension_numbers = #tpu.dot_dimension_numbers<[1], [0], [0], [1], [0, 0, 1, 1], [], []>} : vector<32x48xf32>, vector<48x8xf32>, vector<32x8xf32> -> vector<32x8xf32>
    %c0_45 = arith.constant 0 : index
    %c0_46 = arith.constant 0 : index
    %70 = vector.load %arg15[%c0_45, %c0_46] : memref<1x8xf32, #tpu.memory_space<vmem>>, vector<1x8xf32>
    %71 = vector.broadcast %70 : vector<1x8xf32> to vector<32x8xf32>
    %72 = arith.addf %69, %71 : vector<32x8xf32>
    %c0_47 = arith.constant 0 : index
    %c0_48 = arith.constant 0 : index
    %73 = vector.load %arg18[%c0_47, %c0_48] : memref<32x8xf32, #tpu.memory_space<vmem>>, vector<32x8xf32>
    tpu.vector_store %arg18[%c0_47, %c0_48], %72 {strides = array<i32>} : memref<32x8xf32, #tpu.memory_space<vmem>>, vector<32x8xf32>,
    return
  }
  func.func @transform_0(%arg0: i32) -> (i32, i32) {
    %c0_i32 = arith.constant 0 : i32
    %c0_i32_0 = arith.constant 0 : i32
    %c0_i32_1 = arith.constant 0 : i32
    return %c0_i32, %c0_i32_0 : i32, i32
  }
  func.func @transform_1(%arg0: i32) -> (i32, i32) {
    %c0_i32 = arith.constant 0 : i32
    %c0_i32_0 = arith.constant 0 : i32
    %c0_i32_1 = arith.constant 0 : i32
    return %c0_i32, %c0_i32_0 : i32, i32
  }
  func.func @transform_2(%arg0: i32) -> (i32, i32) {
    %c0_i32 = arith.constant 0 : i32
    %c0_i32_0 = arith.constant 0 : i32
    %c0_i32_1 = arith.constant 0 : i32
    return %c0_i32, %c0_i32_0 : i32, i32
  }
  func.func @transform_3(%arg0: i32) -> (i32, i32) {
    %c0_i32 = arith.constant 0 : i32
    %c0_i32_0 = arith.constant 0 : i32
    %c0_i32_1 = arith.constant 0 : i32
    return %c0_i32, %c0_i32_0 : i32, i32
  }
  func.func @transform_4(%arg0: i32) -> (i32, i32) {
    %c0_i32 = arith.constant 0 : i32
    %c0_i32_0 = arith.constant 0 : i32
    %c0_i32_1 = arith.constant 0 : i32
    return %c0_i32, %c0_i32_0 : i32, i32
  }
  func.func @transform_5(%arg0: i32) -> (i32, i32) {
    %c0_i32 = arith.constant 0 : i32
    %c0_i32_0 = arith.constant 0 : i32
    %c0_i32_1 = arith.constant 0 : i32
    return %c0_i32, %c0_i32_0 : i32, i32
  }
  func.func @transform_6(%arg0: i32) -> (i32, i32) {
    %c0_i32 = arith.constant 0 : i32
    %c0_i32_0 = arith.constant 0 : i32
    %c0_i32_1 = arith.constant 0 : i32
    return %c0_i32, %c0_i32_0 : i32, i32
  }
  func.func @transform_7(%arg0: i32) -> (i32, i32) {
    %c0_i32 = arith.constant 0 : i32
    %c0_i32_0 = arith.constant 0 : i32
    %c0_i32_1 = arith.constant 0 : i32
    return %c0_i32, %c0_i32_0 : i32, i32
  }
  func.func @transform_8(%arg0: i32) -> (i32, i32) {
    %c0_i32 = arith.constant 0 : i32
    %c0_i32_0 = arith.constant 0 : i32
    %c0_i32_1 = arith.constant 0 : i32
    return %c0_i32, %c0_i32_0 : i32, i32
  }
  func.func @transform_9(%arg0: i32) -> (i32, i32) {
    %c0_i32 = arith.constant 0 : i32
    %c0_i32_0 = arith.constant 0 : i32
    %c0_i32_1 = arith.constant 0 : i32
    return %c0_i32, %c0_i32_0 : i32, i32
  }
  func.func @transform_10(%arg0: i32) -> (i32, i32) {
    %c0_i32 = arith.constant 0 : i32
    %c0_i32_0 = arith.constant 0 : i32
    %c0_i32_1 = arith.constant 0 : i32
    return %c0_i32, %c0_i32_0 : i32, i32
  }
  func.func @transform_11(%arg0: i32) -> (i32, i32) {
    %c0_i32 = arith.constant 0 : i32
    %c0_i32_0 = arith.constant 0 : i32
    %c0_i32_1 = arith.constant 0 : i32
    return %c0_i32, %c0_i32_0 : i32, i32
  }
  func.func @transform_12(%arg0: i32) -> (i32, i32) {
    %c0_i32 = arith.constant 0 : i32
    %c0_i32_0 = arith.constant 0 : i32
    %c0_i32_1 = arith.constant 0 : i32
    return %c0_i32, %c0_i32_0 : i32, i32
  }
  func.func @transform_13(%arg0: i32) -> (i32, i32) {
    %c0_i32 = arith.constant 0 : i32
    %c0_i32_0 = arith.constant 0 : i32
    %c0_i32_1 = arith.constant 0 : i32
    return %c0_i32, %c0_i32_0 : i32, i32
  }
  func.func @transform_14(%arg0: i32) -> (i32, i32) {
    %c0_i32 = arith.constant 0 : i32
    %c0_i32_0 = arith.constant 0 : i32
    %c0_i32_1 = arith.constant 0 : i32
    return %c0_i32, %c0_i32_0 : i32, i32
  }
  func.func @transform_15(%arg0: i32) -> (i32, i32) {
    %c0_i32 = arith.constant 0 : i32
    %c0_i32_0 = arith.constant 0 : i32
    %c0_i32_1 = arith.constant 0 : i32
    return %c0_i32, %c0_i32_0 : i32, i32
  }
  func.func @transform_16(%arg0: i32) -> (i32, i32) {
    %c0_i32 = arith.constant 0 : i32
    %c0_i32_0 = arith.constant 0 : i32
    %c0_i32_1 = arith.constant 0 : i32
    return %c0_i32, %c0_i32_0 : i32, i32
  }
  func.func @transform_17(%arg0: i32) -> (i32, i32) {
    %c0_i32 = arith.constant 0 : i32
    %c0_i32_0 = arith.constant 0 : i32
    %c0_i32_1 = arith.constant 0 : i32
    return %c0_i32, %c0_i32_0 : i32, i32
  }
}

module attributes {stable_mosaic.version = 11 : i64} {
  func.func @_tail_kernel(%arg0: i32, %arg1: i32, %arg2: memref<1x4x128xf32, #tpu.memory_space<vmem>>, %arg3: memref<1x48x128xbf16, #tpu.memory_space<vmem>>, %arg4: memref<1x4x1xf32, #tpu.memory_space<vmem>>, %arg5: memref<1x4x16xf32, #tpu.memory_space<vmem>>, %arg6: memref<1x4x16xf32, #tpu.memory_space<vmem>>, %arg7: memref<1x8x4xf32, #tpu.memory_space<vmem>>, %arg8: memref<1x8x1xf32, #tpu.memory_space<vmem>>, %arg9: memref<1x4x8xf32, #tpu.memory_space<vmem>>, %arg10: memref<4x48xf32, #tpu.memory_space<vmem>>, %arg11: memref<4x1xf32, #tpu.memory_space<vmem>>, %arg12: memref<4x4xf32, #tpu.memory_space<vmem>>, %arg13: memref<4x4xf32, #tpu.memory_space<vmem>>, %arg14: memref<4x1xf32, #tpu.memory_space<vmem>>, %arg15: memref<4x4xf32, #tpu.memory_space<vmem>>, %arg16: memref<4x1xf32, #tpu.memory_space<vmem>>, %arg17: memref<1x4x128xf32, #tpu.memory_space<vmem>>) attributes {dimension_semantics = [#tpu.dimension_semantics<parallel>, #tpu.dimension_semantics<parallel>], iteration_bounds = array<i64: 2, 1>, scalar_prefetch = 0 : i64, scratch_operands = 0 : i64, tpu.core_type = #tpu.core_type<tc>, window_params = [{transform_indices = @transform_0, window_bounds = array<i64: 1, 4, 128>}, {transform_indices = @transform_1, window_bounds = array<i64: 1, 48, 128>}, {transform_indices = @transform_2, window_bounds = array<i64: 1, 4, 1>}, {transform_indices = @transform_3, window_bounds = array<i64: 1, 4, 16>}, {transform_indices = @transform_4, window_bounds = array<i64: 1, 4, 16>}, {transform_indices = @transform_5, window_bounds = array<i64: 1, 8, 4>}, {transform_indices = @transform_6, window_bounds = array<i64: 1, 8, 1>}, {transform_indices = @transform_7, window_bounds = array<i64: 1, 4, 8>}, {pipeline_mode = #tpu.pipeline_mode<synchronous>, transform_indices = @transform_8, window_bounds = array<i64: 4, 48>}, {pipeline_mode = #tpu.pipeline_mode<synchronous>, transform_indices = @transform_9, window_bounds = array<i64: 4, 1>}, {pipeline_mode = #tpu.pipeline_mode<synchronous>, transform_indices = @transform_10, window_bounds = array<i64: 4, 4>}, {pipeline_mode = #tpu.pipeline_mode<synchronous>, transform_indices = @transform_11, window_bounds = array<i64: 4, 4>}, {pipeline_mode = #tpu.pipeline_mode<synchronous>, transform_indices = @transform_12, window_bounds = array<i64: 4, 1>}, {pipeline_mode = #tpu.pipeline_mode<synchronous>, transform_indices = @transform_13, window_bounds = array<i64: 4, 4>}, {pipeline_mode = #tpu.pipeline_mode<synchronous>, transform_indices = @transform_14, window_bounds = array<i64: 4, 1>}, {transform_indices = @transform_15, window_bounds = array<i64: 1, 4, 128>}]} {
    %c0 = arith.constant 0 : index
    %c0_0 = arith.constant 0 : index
    %c0_1 = arith.constant 0 : index
    %0 = vector.load %arg2[%c0, %c0_0, %c0_1] : memref<1x4x128xf32, #tpu.memory_space<vmem>>, vector<1x4x128xf32>
    %1 = vector.shape_cast %0 : vector<1x4x128xf32> to vector<4x128xf32>
    %c0_2 = arith.constant 0 : index
    %c0_3 = arith.constant 0 : index
    %2 = vector.load %arg10[%c0_2, %c0_3] : memref<4x48xf32, #tpu.memory_space<vmem>>, vector<4x48xf32>
    %c0_4 = arith.constant 0 : index
    %c0_5 = arith.constant 0 : index
    %c0_6 = arith.constant 0 : index
    %3 = vector.load %arg3[%c0_4, %c0_5, %c0_6] : memref<1x48x128xbf16, #tpu.memory_space<vmem>>, vector<1x48x128xbf16>
    %4 = vector.shape_cast %3 : vector<1x48x128xbf16> to vector<48x128xbf16>
    %5 = arith.extf %4 : vector<48x128xbf16> to vector<48x128xf32>
    %cst = arith.constant dense<0.000000e+00> : vector<4x128xf32>
    %6 = tpu.matmul %2, %5, %cst {dimension_numbers = #tpu.dot_dimension_numbers<[1], [0], [0], [1], [0, 0, 1, 1], [], []>} : vector<4x48xf32>, vector<48x128xf32>, vector<4x128xf32> -> vector<4x128xf32>
    %c0_7 = arith.constant 0 : index
    %c0_8 = arith.constant 0 : index
    %7 = vector.load %arg11[%c0_7, %c0_8] : memref<4x1xf32, #tpu.memory_space<vmem>>, vector<4x1xf32>
    %8 = vector.broadcast %7 : vector<4x1xf32> to vector<4x128xf32>
    %9 = arith.addf %6, %8 : vector<4x128xf32>
    %10 = arith.negf %9 : vector<4x128xf32>
    %11 = math.exp %10 : vector<4x128xf32>
    %cst_9 = arith.constant 1.000000e+00 : f32
    %12 = vector.broadcast %cst_9 : f32 to vector<4x128xf32>
    %13 = arith.addf %12, %11 : vector<4x128xf32>
    %14 = arith.divf %12, %13 : vector<4x128xf32>
    %15 = arith.mulf %9, %14 : vector<4x128xf32>
    %cst_10 = arith.constant 3.000000e-02 : f32
    %16 = vector.broadcast %cst_10 : f32 to vector<4x128xf32>
    %17 = arith.mulf %16, %15 : vector<4x128xf32>
    %18 = arith.addf %1, %17 : vector<4x128xf32>
    %c128_i32 = arith.constant 128 : i32
    %19 = arith.muli %arg1, %c128_i32 : i32
    %20 = tpu.iota {dimensions = array<i32: 1>} : vector<16x128xi32>
    %21 = vector.broadcast %19 : i32 to vector<16x128xi32>
    %22 = arith.addi %21, %20 : vector<16x128xi32>
    %c16_i32 = arith.constant 16 : i32
    %c0_i32 = arith.constant 0 : i32
    %23 = arith.cmpi eq, %c16_i32, %c0_i32 : i32
    %c1_i32 = arith.constant 1 : i32
    %24 = arith.select %23, %c1_i32, %c16_i32 : i32
    %25 = vector.broadcast %24 : i32 to vector<16x128xi32>
    %26 = arith.remsi %22, %25 : vector<16x128xi32>
    %c0_i32_11 = arith.constant 0 : i32
    %27 = vector.broadcast %c0_i32_11 : i32 to vector<16x128xi32>
    %28 = arith.cmpi ne, %26, %27 : vector<16x128xi32>
    %c0_i32_12 = arith.constant 0 : i32
    %29 = vector.broadcast %c0_i32_12 : i32 to vector<16x128xi32>
    %30 = arith.cmpi slt, %26, %29 : vector<16x128xi32>
    %c0_i32_13 = arith.constant 0 : i32
    %31 = arith.cmpi slt, %24, %c0_i32_13 : i32
    %32 = vector.broadcast %31 : i1 to vector<16x128xi1>
    %33 = vector.broadcast %32 : vector<16x128xi1> to vector<16x128xi1>
    %34 = arith.xori %30, %33 : vector<16x128xi1>
    %35 = arith.andi %34, %28 : vector<16x128xi1>
    %36 = vector.broadcast %24 : i32 to vector<16x128xi32>
    %37 = arith.addi %26, %36 : vector<16x128xi32>
    %38 = arith.select %35, %37, %26 : vector<16x128xi1>, vector<16x128xi32>
    %39 = tpu.iota {dimensions = array<i32: 0>} : vector<16x128xi32>
    %40 = arith.cmpi eq, %38, %39 : vector<16x128xi32>
    %41 = arith.extui %40 : vector<16x128xi1> to vector<16x128xi32>
    %42 = arith.sitofp %41 : vector<16x128xi32> to vector<16x128xf32>
    %c0_14 = arith.constant 0 : index
    %c0_15 = arith.constant 0 : index
    %c0_16 = arith.constant 0 : index
    %43 = vector.load %arg5[%c0_14, %c0_15, %c0_16] : memref<1x4x16xf32, #tpu.memory_space<vmem>>, vector<1x4x16xf32>
    %44 = vector.shape_cast %43 : vector<1x4x16xf32> to vector<4x16xf32>
    %cst_17 = arith.constant dense<0.000000e+00> : vector<4x128xf32>
    %45 = tpu.matmul %44, %42, %cst_17 {dimension_numbers = #tpu.dot_dimension_numbers<[1], [0], [0], [1], [0, 0, 1, 1], [], []>} : vector<4x16xf32>, vector<16x128xf32>, vector<4x128xf32> -> vector<4x128xf32>
    %c0_18 = arith.constant 0 : index
    %c0_19 = arith.constant 0 : index
    %46 = vector.load %arg12[%c0_18, %c0_19] : memref<4x4xf32, #tpu.memory_space<vmem>>, vector<4x4xf32>
    %cst_20 = arith.constant dense<0.000000e+00> : vector<4x128xf32>
    %47 = tpu.matmul %46, %1, %cst_20 {dimension_numbers = #tpu.dot_dimension_numbers<[1], [0], [0], [1], [0, 0, 1, 1], [], []>} : vector<4x4xf32>, vector<4x128xf32>, vector<4x128xf32> -> vector<4x128xf32>
    %48 = arith.addf %45, %47 : vector<4x128xf32>
    %49 = arith.negf %48 : vector<4x128xf32>
    %50 = math.exp %49 : vector<4x128xf32>
    %cst_21 = arith.constant 1.000000e+00 : f32
    %51 = vector.broadcast %cst_21 : f32 to vector<4x128xf32>
    %52 = arith.addf %51, %50 : vector<4x128xf32>
    %53 = arith.divf %51, %52 : vector<4x128xf32>
    %54 = arith.mulf %48, %53 : vector<4x128xf32>
    %c0_22 = arith.constant 0 : index
    %c0_23 = arith.constant 0 : index
    %c0_24 = arith.constant 0 : index
    %55 = vector.load %arg6[%c0_22, %c0_23, %c0_24] : memref<1x4x16xf32, #tpu.memory_space<vmem>>, vector<1x4x16xf32>
    %56 = vector.shape_cast %55 : vector<1x4x16xf32> to vector<4x16xf32>
    %cst_25 = arith.constant dense<0.000000e+00> : vector<4x128xf32>
    %57 = tpu.matmul %56, %42, %cst_25 {dimension_numbers = #tpu.dot_dimension_numbers<[1], [0], [0], [1], [0, 0, 1, 1], [], []>} : vector<4x16xf32>, vector<16x128xf32>, vector<4x128xf32> -> vector<4x128xf32>
    %c0_26 = arith.constant 0 : index
    %c0_27 = arith.constant 0 : index
    %58 = vector.load %arg13[%c0_26, %c0_27] : memref<4x4xf32, #tpu.memory_space<vmem>>, vector<4x4xf32>
    %cst_28 = arith.constant dense<0.000000e+00> : vector<4x128xf32>
    %59 = tpu.matmul %58, %1, %cst_28 {dimension_numbers = #tpu.dot_dimension_numbers<[1], [0], [0], [1], [0, 0, 1, 1], [], []>} : vector<4x4xf32>, vector<4x128xf32>, vector<4x128xf32> -> vector<4x128xf32>
    %60 = arith.addf %57, %59 : vector<4x128xf32>
    %61 = arith.negf %60 : vector<4x128xf32>
    %62 = math.exp %61 : vector<4x128xf32>
    %cst_29 = arith.constant 1.000000e+00 : f32
    %63 = vector.broadcast %cst_29 : f32 to vector<4x128xf32>
    %64 = arith.addf %63, %62 : vector<4x128xf32>
    %65 = arith.divf %63, %64 : vector<4x128xf32>
    %66 = arith.mulf %60, %65 : vector<4x128xf32>
    %c0_30 = arith.constant 0 : index
    %c0_31 = arith.constant 0 : index
    %c0_32 = arith.constant 0 : index
    %67 = vector.load %arg4[%c0_30, %c0_31, %c0_32] : memref<1x4x1xf32, #tpu.memory_space<vmem>>, vector<1x4x1xf32>
    %68 = vector.shape_cast %67 : vector<1x4x1xf32> to vector<4x1xf32>
    %69 = vector.broadcast %68 : vector<4x1xf32> to vector<4x128xf32>
    %70 = arith.addf %18, %69 : vector<4x128xf32>
    %71 = arith.addf %70, %54 : vector<4x128xf32>
    %c0_33 = arith.constant 0 : index
    %c0_34 = arith.constant 0 : index
    %c0_35 = arith.constant 0 : index
    %72 = vector.load %arg7[%c0_33, %c0_34, %c0_35] : memref<1x8x4xf32, #tpu.memory_space<vmem>>, vector<1x8x4xf32>
    %73 = vector.shape_cast %72 : vector<1x8x4xf32> to vector<8x4xf32>
    %cst_36 = arith.constant dense<0.000000e+00> : vector<8x128xf32>
    %74 = tpu.matmul %73, %71, %cst_36 {dimension_numbers = #tpu.dot_dimension_numbers<[1], [0], [0], [1], [0, 0, 1, 1], [], []>} : vector<8x4xf32>, vector<4x128xf32>, vector<8x128xf32> -> vector<8x128xf32>
    %c0_37 = arith.constant 0 : index
    %c0_38 = arith.constant 0 : index
    %c0_39 = arith.constant 0 : index
    %75 = vector.load %arg8[%c0_37, %c0_38, %c0_39] : memref<1x8x1xf32, #tpu.memory_space<vmem>>, vector<1x8x1xf32>
    %76 = vector.shape_cast %75 : vector<1x8x1xf32> to vector<8x1xf32>
    %77 = vector.broadcast %76 : vector<8x1xf32> to vector<8x128xf32>
    %78 = arith.addf %74, %77 : vector<8x128xf32>
    %cst_40 = arith.constant dense<0xFF800000> : vector<128xf32>
    %79 = vector.multi_reduction <maximumf>, %78, %cst_40 [0] : vector<8x128xf32> to vector<128xf32>
    %80 = vector.shape_cast %79 : vector<128xf32> to vector<1x128xf32>
    %81 = vector.broadcast %80 : vector<1x128xf32> to vector<8x128xf32>
    %82 = arith.subf %78, %81 : vector<8x128xf32>
    %83 = math.exp %82 : vector<8x128xf32>
    %cst_41 = arith.constant dense<0.000000e+00> : vector<128xf32>
    %84 = vector.multi_reduction <add>, %83, %cst_41 [0] : vector<8x128xf32> to vector<128xf32>
    %85 = vector.shape_cast %84 : vector<128xf32> to vector<1x128xf32>
    %c0_42 = arith.constant 0 : index
    %c0_43 = arith.constant 0 : index
    %c0_44 = arith.constant 0 : index
    %86 = vector.load %arg9[%c0_42, %c0_43, %c0_44] : memref<1x4x8xf32, #tpu.memory_space<vmem>>, vector<1x4x8xf32>
    %87 = vector.shape_cast %86 : vector<1x4x8xf32> to vector<4x8xf32>
    %cst_45 = arith.constant dense<0.000000e+00> : vector<4x128xf32>
    %88 = tpu.matmul %87, %83, %cst_45 {dimension_numbers = #tpu.dot_dimension_numbers<[1], [0], [0], [1], [0, 0, 1, 1], [], []>} : vector<4x8xf32>, vector<8x128xf32>, vector<4x128xf32> -> vector<4x128xf32>
    %89 = vector.broadcast %85 : vector<1x128xf32> to vector<4x128xf32>
    %90 = arith.divf %88, %89 : vector<4x128xf32>
    %c0_46 = arith.constant 0 : index
    %c0_47 = arith.constant 0 : index
    %91 = vector.load %arg14[%c0_46, %c0_47] : memref<4x1xf32, #tpu.memory_space<vmem>>, vector<4x1xf32>
    %92 = vector.broadcast %91 : vector<4x1xf32> to vector<4x128xf32>
    %93 = arith.addf %90, %92 : vector<4x128xf32>
    %94 = arith.addf %71, %93 : vector<4x128xf32>
    %95 = arith.addf %94, %66 : vector<4x128xf32>
    %c0_48 = arith.constant 0 : index
    %c0_49 = arith.constant 0 : index
    %96 = vector.load %arg15[%c0_48, %c0_49] : memref<4x4xf32, #tpu.memory_space<vmem>>, vector<4x4xf32>
    %cst_50 = arith.constant dense<0.000000e+00> : vector<4x128xf32>
    %97 = tpu.matmul %96, %95, %cst_50 {dimension_numbers = #tpu.dot_dimension_numbers<[1], [0], [0], [1], [0, 0, 1, 1], [], []>} : vector<4x4xf32>, vector<4x128xf32>, vector<4x128xf32> -> vector<4x128xf32>
    %c0_51 = arith.constant 0 : index
    %c0_52 = arith.constant 0 : index
    %98 = vector.load %arg16[%c0_51, %c0_52] : memref<4x1xf32, #tpu.memory_space<vmem>>, vector<4x1xf32>
    %99 = vector.broadcast %98 : vector<4x1xf32> to vector<4x128xf32>
    %100 = arith.addf %97, %99 : vector<4x128xf32>
    %c0_53 = arith.constant 0 : index
    %c0_54 = arith.constant 0 : index
    %c0_55 = arith.constant 0 : index
    %101 = vector.load %arg17[%c0_53, %c0_54, %c0_55] : memref<1x4x128xf32, #tpu.memory_space<vmem>>, vector<1x4x128xf32>
    %102 = vector.shape_cast %101 : vector<1x4x128xf32> to vector<4x128xf32>
    %103 = vector.shape_cast %100 : vector<4x128xf32> to vector<1x4x128xf32>
    tpu.vector_store %arg17[%c0_53, %c0_54, %c0_55], %103 {strides = array<i32>} : memref<1x4x128xf32, #tpu.memory_space<vmem>>, vector<1x4x128xf32>,
    return
  }
  func.func @transform_0(%arg0: i32, %arg1: i32) -> (i32, i32, i32) {
    %c0_i32 = arith.constant 0 : i32
    %c0_i32_0 = arith.constant 0 : i32
    return %arg0, %c0_i32, %arg1 : i32, i32, i32
  }
  func.func @transform_1(%arg0: i32, %arg1: i32) -> (i32, i32, i32) {
    %c0_i32 = arith.constant 0 : i32
    %c0_i32_0 = arith.constant 0 : i32
    return %arg0, %c0_i32, %arg1 : i32, i32, i32
  }
  func.func @transform_2(%arg0: i32, %arg1: i32) -> (i32, i32, i32) {
    %c0_i32 = arith.constant 0 : i32
    %c0_i32_0 = arith.constant 0 : i32
    %c0_i32_1 = arith.constant 0 : i32
    return %arg0, %c0_i32, %c0_i32_0 : i32, i32, i32
  }
  func.func @transform_3(%arg0: i32, %arg1: i32) -> (i32, i32, i32) {
    %c0_i32 = arith.constant 0 : i32
    %c0_i32_0 = arith.constant 0 : i32
    %c0_i32_1 = arith.constant 0 : i32
    return %arg0, %c0_i32, %c0_i32_0 : i32, i32, i32
  }
  func.func @transform_4(%arg0: i32, %arg1: i32) -> (i32, i32, i32) {
    %c0_i32 = arith.constant 0 : i32
    %c0_i32_0 = arith.constant 0 : i32
    %c0_i32_1 = arith.constant 0 : i32
    return %arg0, %c0_i32, %c0_i32_0 : i32, i32, i32
  }
  func.func @transform_5(%arg0: i32, %arg1: i32) -> (i32, i32, i32) {
    %c0_i32 = arith.constant 0 : i32
    %c0_i32_0 = arith.constant 0 : i32
    %c0_i32_1 = arith.constant 0 : i32
    return %arg0, %c0_i32, %c0_i32_0 : i32, i32, i32
  }
  func.func @transform_6(%arg0: i32, %arg1: i32) -> (i32, i32, i32) {
    %c0_i32 = arith.constant 0 : i32
    %c0_i32_0 = arith.constant 0 : i32
    %c0_i32_1 = arith.constant 0 : i32
    return %arg0, %c0_i32, %c0_i32_0 : i32, i32, i32
  }
  func.func @transform_7(%arg0: i32, %arg1: i32) -> (i32, i32, i32) {
    %c0_i32 = arith.constant 0 : i32
    %c0_i32_0 = arith.constant 0 : i32
    %c0_i32_1 = arith.constant 0 : i32
    return %arg0, %c0_i32, %c0_i32_0 : i32, i32, i32
  }
  func.func @transform_8(%arg0: i32, %arg1: i32) -> (i32, i32) {
    %c0_i32 = arith.constant 0 : i32
    %c0_i32_0 = arith.constant 0 : i32
    %c0_i32_1 = arith.constant 0 : i32
    return %c0_i32, %c0_i32_0 : i32, i32
  }
  func.func @transform_9(%arg0: i32, %arg1: i32) -> (i32, i32) {
    %c0_i32 = arith.constant 0 : i32
    %c0_i32_0 = arith.constant 0 : i32
    %c0_i32_1 = arith.constant 0 : i32
    return %c0_i32, %c0_i32_0 : i32, i32
  }
  func.func @transform_10(%arg0: i32, %arg1: i32) -> (i32, i32) {
    %c0_i32 = arith.constant 0 : i32
    %c0_i32_0 = arith.constant 0 : i32
    %c0_i32_1 = arith.constant 0 : i32
    return %c0_i32, %c0_i32_0 : i32, i32
  }
  func.func @transform_11(%arg0: i32, %arg1: i32) -> (i32, i32) {
    %c0_i32 = arith.constant 0 : i32
    %c0_i32_0 = arith.constant 0 : i32
    %c0_i32_1 = arith.constant 0 : i32
    return %c0_i32, %c0_i32_0 : i32, i32
  }
  func.func @transform_12(%arg0: i32, %arg1: i32) -> (i32, i32) {
    %c0_i32 = arith.constant 0 : i32
    %c0_i32_0 = arith.constant 0 : i32
    %c0_i32_1 = arith.constant 0 : i32
    return %c0_i32, %c0_i32_0 : i32, i32
  }
  func.func @transform_13(%arg0: i32, %arg1: i32) -> (i32, i32) {
    %c0_i32 = arith.constant 0 : i32
    %c0_i32_0 = arith.constant 0 : i32
    %c0_i32_1 = arith.constant 0 : i32
    return %c0_i32, %c0_i32_0 : i32, i32
  }
  func.func @transform_14(%arg0: i32, %arg1: i32) -> (i32, i32) {
    %c0_i32 = arith.constant 0 : i32
    %c0_i32_0 = arith.constant 0 : i32
    %c0_i32_1 = arith.constant 0 : i32
    return %c0_i32, %c0_i32_0 : i32, i32
  }
  func.func @transform_15(%arg0: i32, %arg1: i32) -> (i32, i32, i32) {
    %c0_i32 = arith.constant 0 : i32
    %c0_i32_0 = arith.constant 0 : i32
    return %arg0, %c0_i32, %arg1 : i32, i32, i32
  }
}

</mosaic_0001>

<llo_original>
// kernel: motion_control_forward.2
$region0: #{motion_control_forward.2}
  #allocation0 [shape = 'u32[]', space=smem, size = 0x4, offset = 0x4, fixed_abs, tag = 'smem constant byte address 0x4 - core index']
  #allocation1 [shape = 'u32[72,128]{1,0:T(1,128)}', space=vmem, size = 0x9000, scoped, tag = 'internal scratch']
  %s0 = inlined_call_operand.vmem [shape: f32[16,32], index: 0, kind: input, shape index: {}]
  %s1 = inlined_call_operand.vmem [shape: f32[1,32], index: 1, kind: input, shape index: {}]
  %s2 = inlined_call_operand.vmem [shape: f32[1,32], index: 2, kind: input, shape index: {}]
  %s3 = inlined_call_operand.vmem [shape: f32[32,32], index: 3, kind: input, shape index: {}]
  %s4 = inlined_call_operand.vmem [shape: f32[1,32], index: 4, kind: input, shape index: {}]
  %s5 = inlined_call_operand.vmem [shape: f32[32,9], index: 5, kind: input, shape index: {}]
  %s6 = inlined_call_operand.vmem [shape: f32[1,9], index: 6, kind: input, shape index: {}]
  %s7 = inlined_call_operand.vmem [shape: f32[2,32], index: 7, kind: input, shape index: {}]
  %s8 = inlined_call_operand.vmem [shape: f32[32,32], index: 8, kind: input, shape index: {}]
  %s9 = inlined_call_operand.vmem [shape: f32[1,32], index: 9, kind: input, shape index: {}]
  %s10 = inlined_call_operand.vmem [shape: f32[32,4], index: 10, kind: input, shape index: {}]
  %s11 = inlined_call_operand.vmem [shape: f32[1,4], index: 11, kind: input, shape index: {}]
  %s12 = inlined_call_operand.vmem [shape: f32[32,48], index: 12, kind: input, shape index: {}]
  %s13 = inlined_call_operand.vmem [shape: f32[48,8], index: 13, kind: input, shape index: {}]
  %s14 = inlined_call_operand.vmem [shape: f32[1,8], index: 14, kind: input, shape index: {}]
  %s15 = inlined_call_operand.vmem [shape: f32[16,9], index: 15, kind: output, shape index: {0}]
  %s16 = inlined_call_operand.vmem [shape: f32[2,4], index: 16, kind: output, shape index: {1}]
  %s17 = inlined_call_operand.vmem [shape: f32[32,8], index: 17, kind: output, shape index: {2}]
  %18 = xla_tuple %s15, %s16, %s17
  %s19 = sld [smem:[#allocation0]]
  $region86: #{motion_control_forward.2} parent=0
    _
  %s21 = ssub.s32 1, %s19
  %s22 = scalar_select 0, %s21, %s19
  // Predicated region
  $region2: #{motion_control_forward.2} parent=0 // pred_check
    _
  $region3: #{motion_control_forward.2} parent=0 // pred_check_branch
    %24 = sbr.rel (0) target = $region5
  $region4: #{motion_control_forward.2} parent=0 // pred_region
    _
  $region5: #{motion_control_forward.2} parent=0 // pred_fallthru
    _
  // Predicated region
  $region6: #{motion_control_forward.2} parent=0 // pred_check
    _
  $region7: #{motion_control_forward.2} parent=0 // pred_check_branch
    %26 = sbr.rel (0) target = $region9
  $region8: #{motion_control_forward.2} parent=0 // pred_region
    _
  $region9: #{motion_control_forward.2} parent=0 // pred_fallthru
    _
  // Predicated region
  $region10: #{motion_control_forward.2} parent=0 // pred_check
    _
  $region11: #{motion_control_forward.2} parent=0 // pred_check_branch
    %28 = sbr.rel (0) target = $region13
  $region12: #{motion_control_forward.2} parent=0 // pred_region
    _
  $region13: #{motion_control_forward.2} parent=0 // pred_fallthru
    _
  // Predicated region
  $region14: #{motion_control_forward.2} parent=0 // pred_check
    _
  $region15: #{motion_control_forward.2} parent=0 // pred_check_branch
    %30 = sbr.rel (0) target = $region17
  $region16: #{motion_control_forward.2} parent=0 // pred_region
    _
  $region17: #{motion_control_forward.2} parent=0 // pred_fallthru
    _
  // Predicated region
  $region18: #{motion_control_forward.2} parent=0 // pred_check
    _
  $region19: #{motion_control_forward.2} parent=0 // pred_check_branch
    %32 = sbr.rel (0) target = $region21
  $region20: #{motion_control_forward.2} parent=0 // pred_region
    _
  $region21: #{motion_control_forward.2} parent=0 // pred_fallthru
    _
  // Predicated region
  $region22: #{motion_control_forward.2} parent=0 // pred_check
    _
  $region23: #{motion_control_forward.2} parent=0 // pred_check_branch
    %34 = sbr.rel (0) target = $region25
  $region24: #{motion_control_forward.2} parent=0 // pred_region
    _
  $region25: #{motion_control_forward.2} parent=0 // pred_fallthru
    _
  // Predicated region
  $region26: #{motion_control_forward.2} parent=0 // pred_check
    _
  $region27: #{motion_control_forward.2} parent=0 // pred_check_branch
    %36 = sbr.rel (0) target = $region29
  $region28: #{motion_control_forward.2} parent=0 // pred_region
    _
  $region29: #{motion_control_forward.2} parent=0 // pred_fallthru
    _
  // Predicated region
  $region30: #{motion_control_forward.2} parent=0 // pred_check
    _
  $region31: #{motion_control_forward.2} parent=0 // pred_check_branch
    %38 = sbr.rel (0) target = $region33
  $region32: #{motion_control_forward.2} parent=0 // pred_region
    _
  $region33: #{motion_control_forward.2} parent=0 // pred_fallthru
    _
  // Predicated region
  $region34: #{motion_control_forward.2} parent=0 // pred_check
    _
  $region35: #{motion_control_forward.2} parent=0 // pred_check_branch
    %40 = sbr.rel (0) target = $region37
  $region36: #{motion_control_forward.2} parent=0 // pred_region
    _
  $region37: #{motion_control_forward.2} parent=0 // pred_fallthru
    _
  // Predicated region
  $region38: #{motion_control_forward.2} parent=0 // pred_check
    _
  $region39: #{motion_control_forward.2} parent=0 // pred_check_branch
    %42 = sbr.rel (0) target = $region41
  $region40: #{motion_control_forward.2} parent=0 // pred_region
    _
  $region41: #{motion_control_forward.2} parent=0 // pred_fallthru
    _
  // Predicated region
  $region42: #{motion_control_forward.2} parent=0 // pred_check
    _
  $region43: #{motion_control_forward.2} parent=0 // pred_check_branch
    %44 = sbr.rel (0) target = $region45
  $region44: #{motion_control_forward.2} parent=0 // pred_region
    _
  $region45: #{motion_control_forward.2} parent=0 // pred_fallthru
    _
  // Predicated region
  $region46: #{motion_control_forward.2} parent=0 // pred_check
    _
  $region47: #{motion_control_forward.2} parent=0 // pred_check_branch
    %46 = sbr.rel (0) target = $region49
  $region48: #{motion_control_forward.2} parent=0 // pred_region
    _
  $region49: #{motion_control_forward.2} parent=0 // pred_fallthru
    _
  // Predicated region
  $region50: #{motion_control_forward.2} parent=0 // pred_check
    _
  $region51: #{motion_control_forward.2} parent=0 // pred_check_branch
    %48 = sbr.rel (0) target = $region53
  $region52: #{motion_control_forward.2} parent=0 // pred_region
    _
  $region53: #{motion_control_forward.2} parent=0 // pred_fallthru
    _
  // Predicated region
  $region54: #{motion_control_forward.2} parent=0 // pred_check
    _
  $region55: #{motion_control_forward.2} parent=0 // pred_check_branch
    %50 = sbr.rel (0) target = $region57
  $region56: #{motion_control_forward.2} parent=0 // pred_region
    _
  $region57: #{motion_control_forward.2} parent=0 // pred_fallthru
    _
  // Predicated region
  $region58: #{motion_control_forward.2} parent=0 // pred_check
    _
  $region59: #{motion_control_forward.2} parent=0 // pred_check_branch
    %52 = sbr.rel (0) target = $region61
  $region60: #{motion_control_forward.2} parent=0 // pred_region
    _
  $region61: #{motion_control_forward.2} parent=0 // pred_fallthru
    _
  %v53 = vld [vmem:[%s0] sm:$0xff]
  %v54 = vld [vmem:[%s0 + $0x8] sm:$0xff]
  %vm55 = vcmask 261120
  %v56 = vsel %vm55, %v53, 0.0
  %57 = vadd.xlane.f32.xlu0 %v56
  %v58 = vpop.xlane.xlu0 %57
  %v59 = vsel %vm55, %v54, 0.0
  %60 = vadd.xlane.f32.xlu0 %v59
  %v61 = vpop.xlane.xlu0 %60
  %v62 = vrcp.pop 32.0
  %v63 = vmul.f32 32.0, %v62
  %v64 = vsub.f32 1.0, %v63
  %v65 = vmul.f32 %v62, %v64
  %v66 = vadd.f32 %v62, %v65
  %vm67 = vweird.f32 %v62
  %v68 = vsel %vm67, %v62, %v66
  %v69 = vmul.f32 %v58, %v68
  %v70 = vmul.f32 %v61, %v68
  %v71 = vsub.f32 %v53, %v69
  %v72 = vsub.f32 %v54, %v70
  %v73 = vmul.f32 %v71, %v71
  %v74 = vmul.f32 %v72, %v72
  %v75 = vsel %vm55, %v73, 0.0
  %76 = vadd.xlane.f32.xlu0 %v75
  %v77 = vpop.xlane.xlu0 %76
  %v78 = vsel %vm55, %v74, 0.0
  %79 = vadd.xlane.f32.xlu0 %v78
  %v80 = vpop.xlane.xlu0 %79
  %v81 = vmul.f32 %v77, %v68
  %v82 = vmul.f32 %v80, %v68
  %v83 = vadd.f32 %v81, 1e-05
  %v84 = vadd.f32 %v82, 1e-05
  %v85 = vrsqrt.pop %v83
  %v86 = vmul.f32 %v85, %v83
  %v87 = vmul.f32 %v86, %v85
  %v88 = vmul.f32 0.5, %v87
  %v89 = vsub.f32 1.5, %v88
  %v90 = vmul.f32 %v85, %v89
  %vm91 = vweird.f32 %v83
  %vm92 = vweird.f32 %v85
  %vm93 = vmor %vm91, %vm92
  %v94 = vsel %vm93, %v85, %v90
  %v95 = vrsqrt.pop %v84
  %v96 = vmul.f32 %v95, %v84
  %v97 = vmul.f32 %v96, %v95
  %v98 = vmul.f32 0.5, %v97
  %v99 = vsub.f32 1.5, %v98
  %v100 = vmul.f32 %v95, %v99
  %vm101 = vweird.f32 %v84
  %vm102 = vweird.f32 %v95
  %vm103 = vmor %vm101, %vm102
  %v104 = vsel %vm103, %v95, %v100
  %v105 = vmul.f32 %v71, %v94
  %v106 = vmul.f32 %v72, %v104
  %v107 = vld [vmem:[%s1] sm:$0x1]
  %v109 = vperm.slane %v107, 0
  %v111 = vmul.f32 %v105, %v109
  %v112 = vmul.f32 %v106, %v109
  %v113 = vld [vmem:[%s2] sm:$0x1]
  %v115 = vperm.slane %v113, 0
  %v117 = vadd.f32 %v111, %v115
  %v118 = vadd.f32 %v112, %v115
  %v119 = vld [vmem:[%s3] sm:$0xff]
  %v120 = vld [vmem:[%s3 + $0x8] sm:$0xff]
  %v121 = vld [vmem:[%s3 + $0x10] sm:$0xff]
  %v122 = vld [vmem:[%s3 + $0x18] sm:$0xff]
  %v123 = vld [vmem:[%s4] sm:$0x1]
  %v125 = vperm.slane %v123, 0
  %v128 = vsel %vm55, %v117, 0
  %v131 = vsel %vm55, %v118, 0
  %133 = vmatpush.msra.mxu0 0.0
  %134 = vmatpush.msra.mxu0 0.0
  %135 = vmatpush.msra.mxu0 0.0
  %136 = vmatpush.msra.mxu0 0.0
  %137 = vmatpush.msra.mxu0 0.0
  %138 = vmatpush.msra.mxu0 0.0
  %139 = vmatpush.msra.mxu0 0.0
  %140 = vmatpush.msra.mxu0 0.0
  %141 = vmatpush.msra.mxu0 0.0
  %142 = vmatpush.msra.mxu0 0.0
  %143 = vmatpush.msra.mxu0 0.0
  %144 = vmatpush.msra.mxu0 0.0
  %145 = vmatpush.msra.mxu0 %v122
  %146 = vmatpush.msra.mxu0 %v121
  %147 = vmatpush.msra.mxu0 %v120
  %148 = vmatpush.msra.mxu0 %v119
  %149 = vmatmul.f32.gmra.mxu0 %v128
  %v150 = vpop.f32.mrf.mxu0
  %v151 = vadd.f32 %v125, %v150
  %152 = vmatmul.f32.gmra.mxu0 %v131
  %v153 = vpop.f32.mrf.mxu0
  %v154 = vadd.f32 %v125, %v153
  %155 = vdwg.mxu0
  %v156 = vmul.f32 %v151, %v151
  %v157 = vmul.f32 %v154, %v154
  %v158 = vmul.f32 %v151, %v156
  %v159 = vmul.f32 %v154, %v157
  %v160 = vmul.f32 %v158, 0.044715
  %v161 = vmul.f32 %v159, 0.044715
  %v162 = vadd.f32 %v151, %v160
  %v163 = vadd.f32 %v154, %v161
  %v164 = vmul.f32 %v162, 0.7978846
  %v165 = vmul.f32 %v163, 0.7978846
  %v166 = vtanh.pop %v164
  %v167 = vtanh.pop %v165
  %v168 = vadd.f32 %v166, 1.0
  %v169 = vadd.f32 %v167, 1.0
  %v170 = vmul.f32 %v168, 0.5
  %v171 = vmul.f32 %v169, 0.5
  %v172 = vmul.f32 %v151, %v170
  %v173 = vmul.f32 %v154, %v171
  %v174 = vld [vmem:[%s5] sm:$0xff]
  %v175 = vld [vmem:[%s5 + $0x8] sm:$0xff]
  %v176 = vld [vmem:[%s5 + $0x10] sm:$0xff]
  %v177 = vld [vmem:[%s5 + $0x18] sm:$0xff]
  %v178 = vld [vmem:[%s6] sm:$0x1]
  %v180 = vperm.slane %v178, 0
  %v183 = vsel %vm55, %v172, 0
  %v186 = vsel %vm55, %v173, 0
  %188 = vmatpush.msra.mxu0 0.0
  %189 = vmatpush.msra.mxu0 0.0
  %190 = vmatpush.msra.mxu0 0.0
  %191 = vmatpush.msra.mxu0 0.0
  %192 = vmatpush.msra.mxu0 0.0
  %193 = vmatpush.msra.mxu0 0.0
  %194 = vmatpush.msra.mxu0 0.0
  %195 = vmatpush.msra.mxu0 0.0
  %196 = vmatpush.msra.mxu0 0.0
  %197 = vmatpush.msra.mxu0 0.0
  %198 = vmatpush.msra.mxu0 0.0
  %199 = vmatpush.msra.mxu0 0.0
  %200 = vmatpush.msra.mxu0 %v177
  %201 = vmatpush.msra.mxu0 %v176
  %202 = vmatpush.msra.mxu0 %v175
  %203 = vmatpush.msra.mxu0 %v174
  %204 = vmatmul.f32.gmra.mxu0 %v183
  %v205 = vpop.f32.mrf.mxu0
  %v206 = vadd.f32 %v180, %v205
  %207 = vmatmul.f32.gmra.mxu0 %v186
  %v208 = vpop.f32.mrf.mxu0
  %v209 = vadd.f32 %v180, %v208
  %210 = vdwg.mxu0
  %vm211 = vcmask 72704
  %212 = vst.msk [vmem:[%s15] sm:$0xff] %vm211, %v206
  %213 = vst.msk [vmem:[%s15 + $0x8] sm:$0xff] %vm211, %v209
  %v214 = vld [vmem:[%s7] sm:$0x3]
  %v215 = vld [vmem:[%s8] sm:$0xff]
  %v216 = vld [vmem:[%s8 + $0x8] sm:$0xff]
  %v217 = vld [vmem:[%s8 + $0x10] sm:$0xff]
  %v218 = vld [vmem:[%s8 + $0x18] sm:$0xff]
  %v219 = vld [vmem:[%s9] sm:$0x1]
  %v221 = vperm.slane %v219, 0
  %v224 = vsel %vm55, %v214, 0
  %226 = vmatpush.msra.mxu0 0.0
  %227 = vmatpush.msra.mxu0 0.0
  %228 = vmatpush.msra.mxu0 0.0
  %229 = vmatpush.msra.mxu0 0.0
  %230 = vmatpush.msra.mxu0 0.0
  %231 = vmatpush.msra.mxu0 0.0
  %232 = vmatpush.msra.mxu0 0.0
  %233 = vmatpush.msra.mxu0 0.0
  %234 = vmatpush.msra.mxu0 0.0
  %235 = vmatpush.msra.mxu0 0.0
  %236 = vmatpush.msra.mxu0 0.0
  %237 = vmatpush.msra.mxu0 0.0
  %238 = vmatpush.msra.mxu0 %v218
  %239 = vmatpush.msra.mxu0 %v217
  %240 = vmatpush.msra.mxu0 %v216
  %241 = vmatpush.msra.mxu0 %v215
  %242 = vmatmul.f32.gmra.mxu0 %v224
  %v243 = vpop.f32.mrf.mxu0
  %v244 = vadd.f32 %v221, %v243
  %245 = vdwg.mxu0
  %v246 = vxor.u32 %v244, 2147483648
  %v247 = vmul.f32 %v246, 1.442695
  %v248 = vpow.pop %v247
  %v249 = vadd.f32 %v248, 1.0
  %v250 = vrcp.pop %v249
  %v251 = vmul.f32 %v249, %v250
  %v252 = vsub.f32 1.0, %v251
  %v253 = vmul.f32 %v250, %v252
  %v254 = vadd.f32 %v250, %v253
  %vm255 = vweird.f32 %v249
  %vm256 = vweird.f32 %v250
  %vm257 = vmor %vm255, %vm256
  %v258 = vsel %vm257, %v250, %v254
  %v259 = vand.u32 2147483647, %v249
  %vm260 = vcmp.eq.f32.partialorder %v259, 8.507059e+37
  %v261 = vand.u32 %v249, 2147483648
  %v262 = vor.u32 1.1754944e-38, %v261
  %v263 = vsel %vm260, %v262, %v258
  %v264 = vmul.f32 1.0, %v263
  %v265 = vmul.f32 %v244, %v264
  %v266 = vld [vmem:[%s10] sm:$0xff]
  %v267 = vld [vmem:[%s10 + $0x8] sm:$0xff]
  %v268 = vld [vmem:[%s10 + $0x10] sm:$0xff]
  %v269 = vld [vmem:[%s10 + $0x18] sm:$0xff]
  %v270 = vld [vmem:[%s11] sm:$0x1]
  %v272 = vperm.slane %v270, 0
  %v275 = vsel %vm55, %v265, 0
  %277 = vmatpush.msra.mxu0 0.0
  %278 = vmatpush.msra.mxu0 0.0
  %279 = vmatpush.msra.mxu0 0.0
  %280 = vmatpush.msra.mxu0 0.0
  %281 = vmatpush.msra.mxu0 0.0
  %282 = vmatpush.msra.mxu0 0.0
  %283 = vmatpush.msra.mxu0 0.0
  %284 = vmatpush.msra.mxu0 0.0
  %285 = vmatpush.msra.mxu0 0.0
  %286 = vmatpush.msra.mxu0 0.0
  %287 = vmatpush.msra.mxu0 0.0
  %288 = vmatpush.msra.mxu0 0.0
  %289 = vmatpush.msra.mxu0 %v269
  %290 = vmatpush.msra.mxu0 %v268
  %291 = vmatpush.msra.mxu0 %v267
  %292 = vmatpush.msra.mxu0 %v266
  %293 = vmatmul.f32.gmra.mxu0 %v275
  %v294 = vpop.f32.mrf.mxu0
  %v295 = vadd.f32 %v272, %v294
  %296 = vdwg.mxu0
  %vm297 = vcmask 25600
  %298 = vst.msk [vmem:[%s16] sm:$0x3] %vm297, %v295
  %v299 = vld [vmem:[%s12] sm:$0xff]
  %v300 = vld [vmem:[%s12 + $0x8] sm:$0xff]
  %v301 = vld [vmem:[%s12 + $0x10] sm:$0xff]
  %v302 = vld [vmem:[%s12 + $0x18] sm:$0xff]
  %v303 = vld [vmem:[%s13] sm:$0xff]
  %v304 = vld [vmem:[%s13 + $0x8] sm:$0xff]
  %v305 = vld [vmem:[%s13 + $0x10] sm:$0xff]
  %v306 = vld [vmem:[%s13 + $0x18] sm:$0xff]
  %v307 = vld [vmem:[%s13 + $0x20] sm:$0xff]
  %v308 = vld [vmem:[%s13 + $0x28] sm:$0xff]
  %v309 = vld [vmem:[%s14] sm:$0x1]
  %v311 = vperm.slane %v309, 0
  %vm313 = vcmask 392192
  %v315 = vsel %vm313, %v299, 0
  %v318 = vsel %vm313, %v300, 0
  %v321 = vsel %vm313, %v301, 0
  %v324 = vsel %vm313, %v302, 0
  %326 = vmatpush.msra.mxu0 0.0
  %327 = vmatpush.msra.mxu0 0.0
  %328 = vmatpush.msra.mxu0 0.0
  %329 = vmatpush.msra.mxu0 0.0
  %330 = vmatpush.msra.mxu0 0.0
  %331 = vmatpush.msra.mxu0 0.0
  %332 = vmatpush.msra.mxu0 0.0
  %333 = vmatpush.msra.mxu0 0.0
  %334 = vmatpush.msra.mxu0 0.0
  %335 = vmatpush.msra.mxu0 0.0
  %336 = vmatpush.msra.mxu0 %v308
  %337 = vmatpush.msra.mxu0 %v307
  %338 = vmatpush.msra.mxu0 %v306
  %339 = vmatpush.msra.mxu0 %v305
  %340 = vmatpush.msra.mxu0 %v304
  %341 = vmatpush.msra.mxu0 %v303
  %342 = vmatmul.f32.gmra.mxu0 %v315
  %v343 = vpop.f32.mrf.mxu0
  %v344 = vadd.f32 %v311, %v343
  %345 = vmatmul.f32.gmra.mxu0 %v318
  %v346 = vpop.f32.mrf.mxu0
  %v347 = vadd.f32 %v311, %v346
  %348 = vmatmul.f32.gmra.mxu0 %v321
  %v349 = vpop.f32.mrf.mxu0
  %v350 = vadd.f32 %v311, %v349
  %351 = vmatmul.f32.gmra.mxu0 %v324
  %v352 = vpop.f32.mrf.mxu0
  %v353 = vadd.f32 %v311, %v352
  %354 = vdwg.mxu0
  %vm355 = vcmask 64512
  %356 = vst.msk [vmem:[%s17] sm:$0xff] %vm355, %v344
  %357 = vst.msk [vmem:[%s17 + $0x8] sm:$0xff] %vm355, %v347
  %358 = vst.msk [vmem:[%s17 + $0x10] sm:$0xff] %vm355, %v350
  %359 = vst.msk [vmem:[%s17 + $0x18] sm:$0xff] %vm355, %v353
  // Predicated region
  $region62: #{motion_control_forward.2} parent=0 // pred_check
    _
  $region63: #{motion_control_forward.2} parent=0 // pred_check_branch
    %361 = sbr.rel (0) target = $region65
  $region64: #{motion_control_forward.2} parent=0 // pred_region
    _
  $region65: #{motion_control_forward.2} parent=0 // pred_fallthru
    _
  // Predicated region
  $region66: #{motion_control_forward.2} parent=0 // pred_check
    _
  $region67: #{motion_control_forward.2} parent=0 // pred_check_branch
    %363 = sbr.rel (0) target = $region69
  $region68: #{motion_control_forward.2} parent=0 // pred_region
    _
  $region69: #{motion_control_forward.2} parent=0 // pred_fallthru
    _
  // Predicated region
  $region70: #{motion_control_forward.2} parent=0 // pred_check
    _
  $region71: #{motion_control_forward.2} parent=0 // pred_check_branch
    %365 = sbr.rel (0) target = $region73
  $region72: #{motion_control_forward.2} parent=0 // pred_region
    _
  $region73: #{motion_control_forward.2} parent=0 // pred_fallthru
    _
  // Predicated region
  $region74: #{motion_control_forward.2} parent=0 // pred_check
    _
  $region75: #{motion_control_forward.2} parent=0 // pred_check_branch
    %367 = sbr.rel (0) target = $region77
  $region76: #{motion_control_forward.2} parent=0 // pred_region
    _
  $region77: #{motion_control_forward.2} parent=0 // pred_fallthru
    _
  // Predicated region
  $region78: #{motion_control_forward.2} parent=0 // pred_check
    _
  $region79: #{motion_control_forward.2} parent=0 // pred_check_branch
    %369 = sbr.rel (0) target = $region81
  $region80: #{motion_control_forward.2} parent=0 // pred_region
    _
  $region81: #{motion_control_forward.2} parent=0 // pred_fallthru
    _
  // Predicated region
  $region82: #{motion_control_forward.2} parent=0 // pred_check
    _
  $region83: #{motion_control_forward.2} parent=0 // pred_check_branch
    %371 = sbr.rel (0) target = $region85
  $region84: #{motion_control_forward.2} parent=0 // pred_region
    _
  $region85: #{motion_control_forward.2} parent=0 // pred_fallthru
    _

// kernel: motion_control_forward.3
$region0: #{motion_control_forward.3}
  #allocation0 [shape = 'u32[]', space=smem, size = 0x4, offset = 0x4, fixed_abs, tag = 'smem constant byte address 0x4 - core index']
  #allocation1 [shape = 'u32[72,128]{1,0:T(1,128)}', space=vmem, size = 0x9000, scoped, tag = 'internal scratch']
  %s0 = inlined_call_operand.vmem [shape: f32[2,4,128], index: 0, kind: input, shape index: {}]
  %s1 = inlined_call_operand.vmem [shape: bf16[2,48,128], index: 1, kind: input, shape index: {}]
  %s2 = inlined_call_operand.vmem [shape: f32[2,4,1], index: 2, kind: input, shape index: {}]
  %s3 = inlined_call_operand.vmem [shape: f32[2,4,16], index: 3, kind: input, shape index: {}]
  %s4 = inlined_call_operand.vmem [shape: f32[2,4,16], index: 4, kind: input, shape index: {}]
  %s5 = inlined_call_operand.vmem [shape: f32[2,8,4], index: 5, kind: input, shape index: {}]
  %s6 = inlined_call_operand.vmem [shape: f32[2,8,1], index: 6, kind: input, shape index: {}]
  %s7 = inlined_call_operand.vmem [shape: f32[2,4,8], index: 7, kind: input, shape index: {}]
  %s8 = inlined_call_operand.vmem [shape: f32[4,48], index: 8, kind: input, shape index: {}]
  %s9 = inlined_call_operand.vmem [shape: f32[4,1], index: 9, kind: input, shape index: {}]
  %s10 = inlined_call_operand.vmem [shape: f32[4,4], index: 10, kind: input, shape index: {}]
  %s11 = inlined_call_operand.vmem [shape: f32[4,4], index: 11, kind: input, shape index: {}]
  %s12 = inlined_call_operand.vmem [shape: f32[4,1], index: 12, kind: input, shape index: {}]
  %s13 = inlined_call_operand.vmem [shape: f32[4,4], index: 13, kind: input, shape index: {}]
  %s14 = inlined_call_operand.vmem [shape: f32[4,1], index: 14, kind: input, shape index: {}]
  %s15 = inlined_call_operand.vmem [shape: f32[2,4,128], index: 15, kind: output, shape index: {}]
  %s16 = sld [smem:[#allocation0]]
  $region93: #{motion_control_forward.3} parent=0
    _
  %s18 = ssub.s32 1, %s16
  %s19 = scalar_select 0, %s18, %s16
  loop: start=0, step=1, limit=4
  $region2: #{motion_control_forward.3} parent=0 // loop_pre_header
    _
  $region3: #{motion_control_forward.3} parent=0 // loop_header
    %s21 = sphi 0, %s25
    %p22 = scmp.ge.s32.totalorder %s21, 4
    %s28 = sphi 0, %s40
    %s29 = sphi 0, %s36
    %s30 = sphi 0, %s28
    %s31 = sphi 0, %s29
    %s32 = sphi 0, %s30
    %s33 = sphi 0, %s31
    %s45 = sphi 0, %s47
    %s48 = sphi 0, %s45
    %s49 = sphi 0, %s48
    %s65 = sphi 0, %s49
    %s73 = sphi 0, %s75
    %s76 = sphi 0, %s73
    %s77 = sphi 0, %s76
    %s93 = sphi 0, %s77
    %s99 = sphi 0, %s101
    %s102 = sphi 0, %s99
    %s103 = sphi 0, %s102
    %s119 = sphi 0, %s103
    %s125 = sphi 0, %s127
    %s128 = sphi 0, %s125
    %s129 = sphi 0, %s128
    %s145 = sphi 0, %s129
    %s151 = sphi 0, %s153
    %s154 = sphi 0, %s151
    %s155 = sphi 0, %s154
    %s171 = sphi 0, %s155
    %s177 = sphi 0, %s179
    %s180 = sphi 0, %s177
    %s181 = sphi 0, %s180
    %s197 = sphi 0, %s181
    %s203 = sphi 0, %s205
    %s206 = sphi 0, %s203
    %s207 = sphi 0, %s206
    %s223 = sphi 0, %s207
    %s229 = sphi 0, %s231
    %s232 = sphi 0, %s229
    %s233 = sphi 0, %s232
    %s249 = sphi 0, %s233
    %s253 = sphi 0, %s253
    %s255 = sphi 0, %s253
    %s256 = sphi 0, %s255
    %s270 = sphi 0, %s256
    %s274 = sphi 0, %s274
    %s276 = sphi 0, %s274
    %s277 = sphi 0, %s276
    %s291 = sphi 0, %s277
    %s295 = sphi 0, %s295
    %s297 = sphi 0, %s295
    %s298 = sphi 0, %s297
    %s312 = sphi 0, %s298
    %s316 = sphi 0, %s316
    %s318 = sphi 0, %s316
    %s319 = sphi 0, %s318
    %s333 = sphi 0, %s319
    %s337 = sphi 0, %s337
    %s339 = sphi 0, %s337
    %s340 = sphi 0, %s339
    %s354 = sphi 0, %s340
    %s358 = sphi 0, %s358
    %s360 = sphi 0, %s358
    %s361 = sphi 0, %s360
    %s375 = sphi 0, %s361
    %s379 = sphi 0, %s379
    %s381 = sphi 0, %s379
    %s382 = sphi 0, %s381
    %s396 = sphi 0, %s382
    %s404 = sphi 0, %s406
    %s407 = sphi 0, %s404
    %s408 = sphi 0, %s407
    %s424 = sphi 0, %s408
  $region4: #{motion_control_forward.3} parent=0 // loop_header_branch
    %24 = sbr.rel (%p22) target = $region8
  $region5: #{motion_control_forward.3} parent=0 // loop_body
    %s26 = ssub.s32 %s21, 1
    %s27 = ssub.s32 %s21, 2
    %s34 = sadd.s32 1, %s29
    %p35 = scmp.ge.s32.totalorder %s34, 1
    %s36 = scalar_select %p35, 0, %s34
    %s37 = sadd.s32 1, %s28
    %s38 = scalar_select %p35, %s37, %s28
    %p39 = scmp.ge.s32.totalorder %s38, 2
    %s40 = scalar_select %p39, 0, %s38
    %s41 = ssub.s32 %s28, %s40
    %s42 = ssub.s32 %s29, %s36
    %s43 = sor.u32 %s41, %s42
    %p44 = scmp.eq.s32.totalorder %s43, 0
    %s46 = sadd.s32 %s45, 1
    %s47 = scalar_select %p44, %s45, %s46
    %p50 = pneg %p44
    %p51 = scmp.eq.s32.totalorder %s21, 1
    %p52 = por %p50, %p51
    %p53 = scmp.ne.s32.totalorder %s45, %s48
    %p54 = scmp.eq.s32.totalorder %s21, 0
    %p55 = por %p53, %p54
    %p56 = scmp.ne.s32.totalorder %s45, %s48
    %p57 = scmp.eq.s32.totalorder %s26, 1
    %p58 = por %p56, %p57
    %p59 = scmp.ne.s32.totalorder %s48, %s49
    %p60 = scmp.eq.s32.totalorder %s26, 0
    %p61 = por %p59, %p60
    %p62 = scmp.ne.s32.totalorder %s48, %s49
    %p63 = scmp.eq.s32.totalorder %s27, 1
    %p64 = por %p62, %p63
    %p66 = scmp.ne.s32.totalorder %s49, %s65
    %p67 = scmp.eq.s32.totalorder %s27, 0
    %p68 = por %p66, %p67
    %s69 = ssub.s32 %s28, %s40
    %s70 = ssub.s32 %s29, %s36
    %s71 = sor.u32 %s69, %s70
    %p72 = scmp.eq.s32.totalorder %s71, 0
    %s74 = sadd.s32 %s73, 1
    %s75 = scalar_select %p72, %s73, %s74
    %p78 = pneg %p72
    %p79 = scmp.eq.s32.totalorder %s21, 1
    %p80 = por %p78, %p79
    %p81 = scmp.ne.s32.totalorder %s73, %s76
    %p82 = scmp.eq.s32.totalorder %s21, 0
    %p83 = por %p81, %p82
    %p84 = scmp.ne.s32.totalorder %s73, %s76
    %p85 = scmp.eq.s32.totalorder %s26, 1
    %p86 = por %p84, %p85
    %p87 = scmp.ne.s32.totalorder %s76, %s77
    %p88 = scmp.eq.s32.totalorder %s26, 0
    %p89 = por %p87, %p88
    %p90 = scmp.ne.s32.totalorder %s76, %s77
    %p91 = scmp.eq.s32.totalorder %s27, 1
    %p92 = por %p90, %p91
    %p94 = scmp.ne.s32.totalorder %s77, %s93
    %p95 = scmp.eq.s32.totalorder %s27, 0
    %p96 = por %p94, %p95
    %s97 = ssub.s32 %s28, %s40
    %p98 = scmp.eq.s32.totalorder %s97, 0
    %s100 = sadd.s32 %s99, 1
    %s101 = scalar_select %p98, %s99, %s100
    %p104 = pneg %p98
    %p105 = scmp.eq.s32.totalorder %s21, 1
    %p106 = por %p104, %p105
    %p107 = scmp.ne.s32.totalorder %s99, %s102
    %p108 = scmp.eq.s32.totalorder %s21, 0
    %p109 = por %p107, %p108
    %p110 = scmp.ne.s32.totalorder %s99, %s102
    %p111 = scmp.eq.s32.totalorder %s26, 1
    %p112 = por %p110, %p111
    %p113 = scmp.ne.s32.totalorder %s102, %s103
    %p114 = scmp.eq.s32.totalorder %s26, 0
    %p115 = por %p113, %p114
    %p116 = scmp.ne.s32.totalorder %s102, %s103
    %p117 = scmp.eq.s32.totalorder %s27, 1
    %p118 = por %p116, %p117
    %p120 = scmp.ne.s32.totalorder %s103, %s119
    %p121 = scmp.eq.s32.totalorder %s27, 0
    %p122 = por %p120, %p121
    %s123 = ssub.s32 %s28, %s40
    %p124 = scmp.eq.s32.totalorder %s123, 0
    %s126 = sadd.s32 %s125, 1
    %s127 = scalar_select %p124, %s125, %s126
    %p130 = pneg %p124
    %p131 = scmp.eq.s32.totalorder %s21, 1
    %p132 = por %p130, %p131
    %p133 = scmp.ne.s32.totalorder %s125, %s128
    %p134 = scmp.eq.s32.totalorder %s21, 0
    %p135 = por %p133, %p134
    %p136 = scmp.ne.s32.totalorder %s125, %s128
    %p137 = scmp.eq.s32.totalorder %s26, 1
    %p138 = por %p136, %p137
    %p139 = scmp.ne.s32.totalorder %s128, %s129
    %p140 = scmp.eq.s32.totalorder %s26, 0
    %p141 = por %p139, %p140
    %p142 = scmp.ne.s32.totalorder %s128, %s129
    %p143 = scmp.eq.s32.totalorder %s27, 1
    %p144 = por %p142, %p143
    %p146 = scmp.ne.s32.totalorder %s129, %s145
    %p147 = scmp.eq.s32.totalorder %s27, 0
    %p148 = por %p146, %p147
    %s149 = ssub.s32 %s28, %s40
    %p150 = scmp.eq.s32.totalorder %s149, 0
    %s152 = sadd.s32 %s151, 1
    %s153 = scalar_select %p150, %s151, %s152
    %p156 = pneg %p150
    %p157 = scmp.eq.s32.totalorder %s21, 1
    %p158 = por %p156, %p157
    %p159 = scmp.ne.s32.totalorder %s151, %s154
    %p160 = scmp.eq.s32.totalorder %s21, 0
    %p161 = por %p159, %p160
    %p162 = scmp.ne.s32.totalorder %s151, %s154
    %p163 = scmp.eq.s32.totalorder %s26, 1
    %p164 = por %p162, %p163
    %p165 = scmp.ne.s32.totalorder %s154, %s155
    %p166 = scmp.eq.s32.totalorder %s26, 0
    %p167 = por %p165, %p166
    %p168 = scmp.ne.s32.totalorder %s154, %s155
    %p169 = scmp.eq.s32.totalorder %s27, 1
    %p170 = por %p168, %p169
    %p172 = scmp.ne.s32.totalorder %s155, %s171
    %p173 = scmp.eq.s32.totalorder %s27, 0
    %p174 = por %p172, %p173
    %s175 = ssub.s32 %s28, %s40
    %p176 = scmp.eq.s32.totalorder %s175, 0
    %s178 = sadd.s32 %s177, 1
    %s179 = scalar_select %p176, %s177, %s178
    %p182 = pneg %p176
    %p183 = scmp.eq.s32.totalorder %s21, 1
    %p184 = por %p182, %p183
    %p185 = scmp.ne.s32.totalorder %s177, %s180
    %p186 = scmp.eq.s32.totalorder %s21, 0
    %p187 = por %p185, %p186
    %p188 = scmp.ne.s32.totalorder %s177, %s180
    %p189 = scmp.eq.s32.totalorder %s26, 1
    %p190 = por %p188, %p189
    %p191 = scmp.ne.s32.totalorder %s180, %s181
    %p192 = scmp.eq.s32.totalorder %s26, 0
    %p193 = por %p191, %p192
    %p194 = scmp.ne.s32.totalorder %s180, %s181
    %p195 = scmp.eq.s32.totalorder %s27, 1
    %p196 = por %p194, %p195
    %p198 = scmp.ne.s32.totalorder %s181, %s197
    %p199 = scmp.eq.s32.totalorder %s27, 0
    %p200 = por %p198, %p199
    %s201 = ssub.s32 %s28, %s40
    %p202 = scmp.eq.s32.totalorder %s201, 0
    %s204 = sadd.s32 %s203, 1
    %s205 = scalar_select %p202, %s203, %s204
    %p208 = pneg %p202
    %p209 = scmp.eq.s32.totalorder %s21, 1
    %p210 = por %p208, %p209
    %p211 = scmp.ne.s32.totalorder %s203, %s206
    %p212 = scmp.eq.s32.totalorder %s21, 0
    %p213 = por %p211, %p212
    %p214 = scmp.ne.s32.totalorder %s203, %s206
    %p215 = scmp.eq.s32.totalorder %s26, 1
    %p216 = por %p214, %p215
    %p217 = scmp.ne.s32.totalorder %s206, %s207
    %p218 = scmp.eq.s32.totalorder %s26, 0
    %p219 = por %p217, %p218
    %p220 = scmp.ne.s32.totalorder %s206, %s207
    %p221 = scmp.eq.s32.totalorder %s27, 1
    %p222 = por %p220, %p221
    %p224 = scmp.ne.s32.totalorder %s207, %s223
    %p225 = scmp.eq.s32.totalorder %s27, 0
    %p226 = por %p224, %p225
    %s227 = ssub.s32 %s28, %s40
    %p228 = scmp.eq.s32.totalorder %s227, 0
    %s230 = sadd.s32 %s229, 1
    %s231 = scalar_select %p228, %s229, %s230
    %p234 = pneg %p228
    %p235 = scmp.eq.s32.totalorder %s21, 1
    %p236 = por %p234, %p235
    %p237 = scmp.ne.s32.totalorder %s229, %s232
    %p238 = scmp.eq.s32.totalorder %s21, 0
    %p239 = por %p237, %p238
    %p240 = scmp.ne.s32.totalorder %s229, %s232
    %p241 = scmp.eq.s32.totalorder %s26, 1
    %p242 = por %p240, %p241
    %p243 = scmp.ne.s32.totalorder %s232, %s233
    %p244 = scmp.eq.s32.totalorder %s26, 0
    %p245 = por %p243, %p244
    %p246 = scmp.ne.s32.totalorder %s232, %s233
    %p247 = scmp.eq.s32.totalorder %s27, 1
    %p248 = por %p246, %p247
    %p250 = scmp.ne.s32.totalorder %s233, %s249
    %p251 = scmp.eq.s32.totalorder %s27, 0
    %p252 = por %p250, %p251
    %s254 = sadd.s32 %s253, 1
    %p257 = scmp.eq.s32.totalorder %s21, 1
    %p258 = scmp.ne.s32.totalorder %s253, %s255
    %p259 = scmp.eq.s32.totalorder %s21, 0
    %p260 = por %p258, %p259
    %p261 = scmp.ne.s32.totalorder %s253, %s255
    %p262 = scmp.eq.s32.totalorder %s26, 1
    %p263 = por %p261, %p262
    %p264 = scmp.ne.s32.totalorder %s255, %s256
    %p265 = scmp.eq.s32.totalorder %s26, 0
    %p266 = por %p264, %p265
    %p267 = scmp.ne.s32.totalorder %s255, %s256
    %p268 = scmp.eq.s32.totalorder %s27, 1
    %p269 = por %p267, %p268
    %p271 = scmp.ne.s32.totalorder %s256, %s270
    %p272 = scmp.eq.s32.totalorder %s27, 0
    %p273 = por %p271, %p272
    %s275 = sadd.s32 %s274, 1
    %p278 = scmp.eq.s32.totalorder %s21, 1
    %p279 = scmp.ne.s32.totalorder %s274, %s276
    %p280 = scmp.eq.s32.totalorder %s21, 0
    %p281 = por %p279, %p280
    %p282 = scmp.ne.s32.totalorder %s274, %s276
    %p283 = scmp.eq.s32.totalorder %s26, 1
    %p284 = por %p282, %p283
    %p285 = scmp.ne.s32.totalorder %s276, %s277
    %p286 = scmp.eq.s32.totalorder %s26, 0
    %p287 = por %p285, %p286
    %p288 = scmp.ne.s32.totalorder %s276, %s277
    %p289 = scmp.eq.s32.totalorder %s27, 1
    %p290 = por %p288, %p289
    %p292 = scmp.ne.s32.totalorder %s277, %s291
    %p293 = scmp.eq.s32.totalorder %s27, 0
    %p294 = por %p292, %p293
    %s296 = sadd.s32 %s295, 1
    %p299 = scmp.eq.s32.totalorder %s21, 1
    %p300 = scmp.ne.s32.totalorder %s295, %s297
    %p301 = scmp.eq.s32.totalorder %s21, 0
    %p302 = por %p300, %p301
    %p303 = scmp.ne.s32.totalorder %s295, %s297
    %p304 = scmp.eq.s32.totalorder %s26, 1
    %p305 = por %p303, %p304
    %p306 = scmp.ne.s32.totalorder %s297, %s298
    %p307 = scmp.eq.s32.totalorder %s26, 0
    %p308 = por %p306, %p307
    %p309 = scmp.ne.s32.totalorder %s297, %s298
    %p310 = scmp.eq.s32.totalorder %s27, 1
    %p311 = por %p309, %p310
    %p313 = scmp.ne.s32.totalorder %s298, %s312
    %p314 = scmp.eq.s32.totalorder %s27, 0
    %p315 = por %p313, %p314
    %s317 = sadd.s32 %s316, 1
    %p320 = scmp.eq.s32.totalorder %s21, 1
    %p321 = scmp.ne.s32.totalorder %s316, %s318
    %p322 = scmp.eq.s32.totalorder %s21, 0
    %p323 = por %p321, %p322
    %p324 = scmp.ne.s32.totalorder %s316, %s318
    %p325 = scmp.eq.s32.totalorder %s26, 1
    %p326 = por %p324, %p325
    %p327 = scmp.ne.s32.totalorder %s318, %s319
    %p328 = scmp.eq.s32.totalorder %s26, 0
    %p329 = por %p327, %p328
    %p330 = scmp.ne.s32.totalorder %s318, %s319
    %p331 = scmp.eq.s32.totalorder %s27, 1
    %p332 = por %p330, %p331
    %p334 = scmp.ne.s32.totalorder %s319, %s333
    %p335 = scmp.eq.s32.totalorder %s27, 0
    %p336 = por %p334, %p335
    %s338 = sadd.s32 %s337, 1
    %p341 = scmp.eq.s32.totalorder %s21, 1
    %p342 = scmp.ne.s32.totalorder %s337, %s339
    %p343 = scmp.eq.s32.totalorder %s21, 0
    %p344 = por %p342, %p343
    %p345 = scmp.ne.s32.totalorder %s337, %s339
    %p346 = scmp.eq.s32.totalorder %s26, 1
    %p347 = por %p345, %p346
    %p348 = scmp.ne.s32.totalorder %s339, %s340
    %p349 = scmp.eq.s32.totalorder %s26, 0
    %p350 = por %p348, %p349
    %p351 = scmp.ne.s32.totalorder %s339, %s340
    %p352 = scmp.eq.s32.totalorder %s27, 1
    %p353 = por %p351, %p352
    %p355 = scmp.ne.s32.totalorder %s340, %s354
    %p356 = scmp.eq.s32.totalorder %s27, 0
    %p357 = por %p355, %p356
    %s359 = sadd.s32 %s358, 1
    %p362 = scmp.eq.s32.totalorder %s21, 1
    %p363 = scmp.ne.s32.totalorder %s358, %s360
    %p364 = scmp.eq.s32.totalorder %s21, 0
    %p365 = por %p363, %p364
    %p366 = scmp.ne.s32.totalorder %s358, %s360
    %p367 = scmp.eq.s32.totalorder %s26, 1
    %p368 = por %p366, %p367
    %p369 = scmp.ne.s32.totalorder %s360, %s361
    %p370 = scmp.eq.s32.totalorder %s26, 0
    %p371 = por %p369, %p370
    %p372 = scmp.ne.s32.totalorder %s360, %s361
    %p373 = scmp.eq.s32.totalorder %s27, 1
    %p374 = por %p372, %p373
    %p376 = scmp.ne.s32.totalorder %s361, %s375
    %p377 = scmp.eq.s32.totalorder %s27, 0
    %p378 = por %p376, %p377
    %s380 = sadd.s32 %s379, 1
    %p383 = scmp.eq.s32.totalorder %s21, 1
    %p384 = scmp.ne.s32.totalorder %s379, %s381
    %p385 = scmp.eq.s32.totalorder %s21, 0
    %p386 = por %p384, %p385
    %p387 = scmp.ne.s32.totalorder %s379, %s381
    %p388 = scmp.eq.s32.totalorder %s26, 1
    %p389 = por %p387, %p388
    %p390 = scmp.ne.s32.totalorder %s381, %s382
    %p391 = scmp.eq.s32.totalorder %s26, 0
    %p392 = por %p390, %p391
    %p393 = scmp.ne.s32.totalorder %s381, %s382
    %p394 = scmp.eq.s32.totalorder %s27, 1
    %p395 = por %p393, %p394
    %p397 = scmp.ne.s32.totalorder %s382, %s396
    %p398 = scmp.eq.s32.totalorder %s27, 0
    %p399 = por %p397, %p398
    %s400 = ssub.s32 %s28, %s40
    %s401 = ssub.s32 %s29, %s36
    %s402 = sor.u32 %s400, %s401
    %p403 = scmp.eq.s32.totalorder %s402, 0
    %s405 = sadd.s32 %s404, 1
    %s406 = scalar_select %p403, %s404, %s405
    %p409 = pneg %p403
    %p410 = scmp.eq.s32.totalorder %s21, 1
    %p411 = por %p409, %p410
    %p412 = scmp.ne.s32.totalorder %s404, %s407
    %p413 = scmp.eq.s32.totalorder %s21, 0
    %p414 = por %p412, %p413
    %p415 = scmp.ne.s32.totalorder %s404, %s407
    %p416 = scmp.eq.s32.totalorder %s26, 1
    %p417 = por %p415, %p416
    %p418 = scmp.ne.s32.totalorder %s407, %s408
    %p419 = scmp.eq.s32.totalorder %s26, 0
    %p420 = por %p418, %p419
    %p421 = scmp.ne.s32.totalorder %s407, %s408
    %p422 = scmp.eq.s32.totalorder %s27, 1
    %p423 = por %p421, %p422
    %p425 = scmp.ne.s32.totalorder %s408, %s424
    %p426 = scmp.eq.s32.totalorder %s27, 0
    %p427 = por %p425, %p426
    %p428 = scmp.le.s32.totalorder 1, %s21
    %p429 = scmp.lt.s32.totalorder %s21, 3
    %p430 = pnand %p428, %p429
    %p431 = pneg %p430
    // Predicated region
    $region9: #{motion_control_forward.3} parent=5 // pred_check
      _
    $region10: #{motion_control_forward.3} parent=5 // pred_check_branch
      %433 = sbr.rel (%p430) target = $region12
    $region11: #{motion_control_forward.3} parent=5 // pred_region
      %s434 = ssub.s32 %s21, 1
      // Predicated region
      $region13: #{motion_control_forward.3} parent=11 // pred_check
        %p435 = pneg %p266
      $region14: #{motion_control_forward.3} parent=11 // pred_check_branch
        %437 = sbr.rel (%p435) target = $region16
      $region15: #{motion_control_forward.3} parent=11 // pred_region
        _
      $region16: #{motion_control_forward.3} parent=11 // pred_fallthru
        _
      // Predicated region
      $region17: #{motion_control_forward.3} parent=11 // pred_check
        %p438 = pneg %p287
      $region18: #{motion_control_forward.3} parent=11 // pred_check_branch
        %440 = sbr.rel (%p438) target = $region20
      $region19: #{motion_control_forward.3} parent=11 // pred_region
        _
      $region20: #{motion_control_forward.3} parent=11 // pred_fallthru
        _
      // Predicated region
      $region21: #{motion_control_forward.3} parent=11 // pred_check
        %p441 = pneg %p308
      $region22: #{motion_control_forward.3} parent=11 // pred_check_branch
        %443 = sbr.rel (%p441) target = $region24
      $region23: #{motion_control_forward.3} parent=11 // pred_region
        _
      $region24: #{motion_control_forward.3} parent=11 // pred_fallthru
        _
      // Predicated region
      $region25: #{motion_control_forward.3} parent=11 // pred_check
        %p444 = pneg %p329
      $region26: #{motion_control_forward.3} parent=11 // pred_check_branch
        %446 = sbr.rel (%p444) target = $region28
      $region27: #{motion_control_forward.3} parent=11 // pred_region
        _
      $region28: #{motion_control_forward.3} parent=11 // pred_fallthru
        _
      // Predicated region
      $region29: #{motion_control_forward.3} parent=11 // pred_check
        %p447 = pneg %p350
      $region30: #{motion_control_forward.3} parent=11 // pred_check_branch
        %449 = sbr.rel (%p447) target = $region32
      $region31: #{motion_control_forward.3} parent=11 // pred_region
        _
      $region32: #{motion_control_forward.3} parent=11 // pred_fallthru
        _
      // Predicated region
      $region33: #{motion_control_forward.3} parent=11 // pred_check
        %p450 = pneg %p371
      $region34: #{motion_control_forward.3} parent=11 // pred_check_branch
        %452 = sbr.rel (%p450) target = $region36
      $region35: #{motion_control_forward.3} parent=11 // pred_region
        _
      $region36: #{motion_control_forward.3} parent=11 // pred_fallthru
        _
      // Predicated region
      $region37: #{motion_control_forward.3} parent=11 // pred_check
        %p453 = pneg %p392
      $region38: #{motion_control_forward.3} parent=11 // pred_check_branch
        %455 = sbr.rel (%p453) target = $region40
      $region39: #{motion_control_forward.3} parent=11 // pred_region
        _
      $region40: #{motion_control_forward.3} parent=11 // pred_fallthru
        _
    $region12: #{motion_control_forward.3} parent=5 // pred_fallthru
      _
    %p456 = scmp.lt.s32.totalorder %s21, 2
    // Predicated region
    $region41: #{motion_control_forward.3} parent=5 // pred_check
      %p457 = pneg %p456
    $region42: #{motion_control_forward.3} parent=5 // pred_check_branch
      %459 = sbr.rel (%p457) target = $region44
    $region43: #{motion_control_forward.3} parent=5 // pred_region
      // Predicated region
      $region45: #{motion_control_forward.3} parent=43 // pred_check
        %p460 = pneg %p55
      $region46: #{motion_control_forward.3} parent=43 // pred_check_branch
        %462 = sbr.rel (%p460) target = $region48
      $region47: #{motion_control_forward.3} parent=43 // pred_region
        %p463 = scmp.lt.s32.totalorder %s28, 1
        %s464 = scalar_select %p463, %s28, 1
        %p465 = scmp.lt.s32.totalorder %s29, 0
        %s466 = scalar_select %p465, %s29, 0
        %s467 = sadd.s32 %s466, %s464
        %s468 = smul.addr %s467, 4
        %s469 = scalar_lea.vmem %s0, %s468
      $region48: #{motion_control_forward.3} parent=43 // pred_fallthru
        _
      // Predicated region
      $region49: #{motion_control_forward.3} parent=43 // pred_check
        %p470 = pneg %p83
      $region50: #{motion_control_forward.3} parent=43 // pred_check_branch
        %472 = sbr.rel (%p470) target = $region52
      $region51: #{motion_control_forward.3} parent=43 // pred_region
        %p473 = scmp.lt.s32.totalorder %s28, 1
        %s474 = scalar_select %p473, %s28, 1
        %p475 = scmp.lt.s32.totalorder %s29, 0
        %s476 = scalar_select %p475, %s29, 0
        %s477 = smul.addr %s474, 6
        %s478 = sadd.s32 %s476, %s477
        %s479 = smul.addr %s478, 4
        %s480 = scalar_lea.vmem %s1, %s479
      $region52: #{motion_control_forward.3} parent=43 // pred_fallthru
        _
      // Predicated region
      $region53: #{motion_control_forward.3} parent=43 // pred_check
        %p481 = pneg %p109
      $region54: #{motion_control_forward.3} parent=43 // pred_check_branch
        %483 = sbr.rel (%p481) target = $region56
      $region55: #{motion_control_forward.3} parent=43 // pred_region
        %p484 = scmp.lt.s32.totalorder %s28, 1
        %s485 = scalar_select %p484, %s28, 1
        %s486 = smul.addr %s485, 4
        %s487 = scalar_lea.vmem %s2, %s486
      $region56: #{motion_control_forward.3} parent=43 // pred_fallthru
        _
      // Predicated region
      $region57: #{motion_control_forward.3} parent=43 // pred_check
        %p488 = pneg %p135
      $region58: #{motion_control_forward.3} parent=43 // pred_check_branch
        %490 = sbr.rel (%p488) target = $region60
      $region59: #{motion_control_forward.3} parent=43 // pred_region
        %p491 = scmp.lt.s32.totalorder %s28, 1
        %s492 = scalar_select %p491, %s28, 1
        %s493 = smul.addr %s492, 4
        %s494 = scalar_lea.vmem %s3, %s493
      $region60: #{motion_control_forward.3} parent=43 // pred_fallthru
        _
      // Predicated region
      $region61: #{motion_control_forward.3} parent=43 // pred_check
        %p495 = pneg %p161
      $region62: #{motion_control_forward.3} parent=43 // pred_check_branch
        %497 = sbr.rel (%p495) target = $region64
      $region63: #{motion_control_forward.3} parent=43 // pred_region
        %p498 = scmp.lt.s32.totalorder %s28, 1
        %s499 = scalar_select %p498, %s28, 1
        %s500 = smul.addr %s499, 4
        %s501 = scalar_lea.vmem %s4, %s500
      $region64: #{motion_control_forward.3} parent=43 // pred_fallthru
        _
      // Predicated region
      $region65: #{motion_control_forward.3} parent=43 // pred_check
        %p502 = pneg %p187
      $region66: #{motion_control_forward.3} parent=43 // pred_check_branch
        %504 = sbr.rel (%p502) target = $region68
      $region67: #{motion_control_forward.3} parent=43 // pred_region
        %p505 = scmp.lt.s32.totalorder %s28, 1
        %s506 = scalar_select %p505, %s28, 1
        %s507 = smul.addr %s506, 8
        %s508 = scalar_lea.vmem %s5, %s507
      $region68: #{motion_control_forward.3} parent=43 // pred_fallthru
        _
      // Predicated region
      $region69: #{motion_control_forward.3} parent=43 // pred_check
        %p509 = pneg %p213
      $region70: #{motion_control_forward.3} parent=43 // pred_check_branch
        %511 = sbr.rel (%p509) target = $region72
      $region71: #{motion_control_forward.3} parent=43 // pred_region
        %p512 = scmp.lt.s32.totalorder %s28, 1
        %s513 = scalar_select %p512, %s28, 1
        %s514 = smul.addr %s513, 8
        %s515 = scalar_lea.vmem %s6, %s514
      $region72: #{motion_control_forward.3} parent=43 // pred_fallthru
        _
      // Predicated region
      $region73: #{motion_control_forward.3} parent=43 // pred_check
        %p516 = pneg %p239
      $region74: #{motion_control_forward.3} parent=43 // pred_check_branch
        %518 = sbr.rel (%p516) target = $region76
      $region75: #{motion_control_forward.3} parent=43 // pred_region
        %p519 = scmp.lt.s32.totalorder %s28, 1
        %s520 = scalar_select %p519, %s28, 1
        %s521 = smul.addr %s520, 4
        %s522 = scalar_lea.vmem %s7, %s521
      $region76: #{motion_control_forward.3} parent=43 // pred_fallthru
        _
    $region44: #{motion_control_forward.3} parent=5 // pred_fallthru
      _
    %p523 = scmp.le.s32.totalorder 1, %s21
    %p524 = scmp.lt.s32.totalorder %s21, 3
    %p525 = pnand %p523, %p524
    %p526 = pneg %p525
    // Predicated region
    $region77: #{motion_control_forward.3} parent=5 // pred_check
      _
    $region78: #{motion_control_forward.3} parent=5 // pred_check_branch
      %528 = sbr.rel (%p525) target = $region80
    $region79: #{motion_control_forward.3} parent=5 // pred_region
      %s529 = ssub.s32 %s21, 1
      %p530 = scmp.lt.s32.totalorder %s30, 1
      %s531 = scalar_select %p530, %s30, 1
      %p532 = scmp.lt.s32.totalorder %s31, 0
      %s533 = scalar_select %p532, %s31, 0
      %s534 = sadd.s32 %s533, %s531
      %s535 = smul.addr %s534, 4
      %s536 = scalar_lea.vmem %s0, %s535
      %p537 = pneg %p61
      %p538 = pneg %p58
      %p539 = scmp.lt.s32.totalorder %s30, 1
      %s540 = scalar_select %p539, %s30, 1
      %p541 = scmp.lt.s32.totalorder %s31, 0
      %s542 = scalar_select %p541, %s31, 0
      %s543 = smul.addr %s540, 6
      %s544 = sadd.s32 %s542, %s543
      %s545 = smul.addr %s544, 4
      %s546 = scalar_lea.vmem %s1, %s545
      %p547 = pneg %p89
      %p548 = pneg %p86
      %p549 = scmp.lt.s32.totalorder %s30, 1
      %s550 = scalar_select %p549, %s30, 1
      %s551 = smul.addr %s550, 4
      %s552 = scalar_lea.vmem %s2, %s551
      %p553 = pneg %p115
      %p554 = pneg %p112
      %p555 = scmp.lt.s32.totalorder %s30, 1
      %s556 = scalar_select %p555, %s30, 1
      %s557 = smul.addr %s556, 4
      %s558 = scalar_lea.vmem %s3, %s557
      %p559 = pneg %p141
      %p560 = pneg %p138
      %p561 = scmp.lt.s32.totalorder %s30, 1
      %s562 = scalar_select %p561, %s30, 1
      %s563 = smul.addr %s562, 4
      %s564 = scalar_lea.vmem %s4, %s563
      %p565 = pneg %p167
      %p566 = pneg %p164
      %p567 = scmp.lt.s32.totalorder %s30, 1
      %s568 = scalar_select %p567, %s30, 1
      %s569 = smul.addr %s568, 8
      %s570 = scalar_lea.vmem %s5, %s569
      %p571 = pneg %p193
      %p572 = pneg %p190
      %p573 = scmp.lt.s32.totalorder %s30, 1
      %s574 = scalar_select %p573, %s30, 1
      %s575 = smul.addr %s574, 8
      %s576 = scalar_lea.vmem %s6, %s575
      %p577 = pneg %p219
      %p578 = pneg %p216
      %p579 = scmp.lt.s32.totalorder %s30, 1
      %s580 = scalar_select %p579, %s30, 1
      %s581 = smul.addr %s580, 4
      %s582 = scalar_lea.vmem %s7, %s581
      %p583 = pneg %p245
      %p584 = pneg %p242
      %p585 = pneg %p266
      %p586 = pneg %p263
      %p587 = pneg %p287
      %p588 = pneg %p284
      %p589 = pneg %p308
      %p590 = pneg %p305
      %p591 = pneg %p329
      %p592 = pneg %p326
      %p593 = pneg %p350
      %p594 = pneg %p347
      %p595 = pneg %p371
      %p596 = pneg %p368
      %p597 = pneg %p392
      %p598 = pneg %p389
      %p599 = pneg %p420
      %p600 = pneg %p417
      %p601 = scmp.lt.s32.totalorder %s30, 1
      %s602 = scalar_select %p601, %s30, 1
      %p603 = scmp.lt.s32.totalorder %s31, 0
      %s604 = scalar_select %p603, %s31, 0
      %s605 = sadd.s32 %s604, %s602
      %s606 = smul.addr %s605, 4
      %s607 = scalar_lea.vmem %s15, %s606
      %p608 = scmp.lt.s32.totalorder %s30, 1
      %s609 = scalar_select %p608, %s30, 1
      %p610 = scmp.lt.s32.totalorder %s31, 0
      %s611 = scalar_select %p610, %s31, 0
      %s612 = sadd.s32 %s611, %s609
      %s613 = smul.addr %s612, 4
      %s614 = scalar_lea.vmem %s0, %s613
      %p615 = scmp.lt.s32.totalorder %s30, 1
      %s616 = scalar_select %p615, %s30, 1
      %p617 = scmp.lt.s32.totalorder %s31, 0
      %s618 = scalar_select %p617, %s31, 0
      %s619 = smul.addr %s616, 6
      %s620 = sadd.s32 %s618, %s619
      %s621 = smul.addr %s620, 4
      %s622 = scalar_lea.vmem %s1, %s621
      %p623 = scmp.lt.s32.totalorder %s30, 1
      %s624 = scalar_select %p623, %s30, 1
      %s625 = smul.addr %s624, 4
      %s626 = scalar_lea.vmem %s2, %s625
      %p627 = scmp.lt.s32.totalorder %s30, 1
      %s628 = scalar_select %p627, %s30, 1
      %s629 = smul.addr %s628, 4
      %s630 = scalar_lea.vmem %s3, %s629
      %p631 = scmp.lt.s32.totalorder %s30, 1
      %s632 = scalar_select %p631, %s30, 1
      %s633 = smul.addr %s632, 4
      %s634 = scalar_lea.vmem %s4, %s633
      %p635 = scmp.lt.s32.totalorder %s30, 1
      %s636 = scalar_select %p635, %s30, 1
      %s637 = smul.addr %s636, 8
      %s638 = scalar_lea.vmem %s5, %s637
      %p639 = scmp.lt.s32.totalorder %s30, 1
      %s640 = scalar_select %p639, %s30, 1
      %s641 = smul.addr %s640, 8
      %s642 = scalar_lea.vmem %s6, %s641
      %p643 = scmp.lt.s32.totalorder %s30, 1
      %s644 = scalar_select %p643, %s30, 1
      %s645 = smul.addr %s644, 4
      %s646 = scalar_lea.vmem %s7, %s645
      %p647 = scmp.lt.s32.totalorder %s30, 1
      %s648 = scalar_select %p647, %s30, 1
      %p649 = scmp.lt.s32.totalorder %s31, 0
      %s650 = scalar_select %p649, %s31, 0
      %s651 = sadd.s32 %s650, %s648
      %s652 = smul.addr %s651, 4
      %s653 = scalar_lea.vmem %s15, %s652
      %v654 = vld [vmem:[%s614] sm:$0xf]
      %v655 = vld [vmem:[%s8] sm:$0xf]
      %v656 = vld [vmem:[%s622] sm:$0xf]
      %v657 = vld [vmem:[%s622 + $0x4] sm:$0xf]
      %v658 = vld [vmem:[%s622 + $0x8] sm:$0xf]
      %v659 = vld [vmem:[%s622 + $0xc] sm:$0xf]
      %v660 = vld [vmem:[%s622 + $0x10] sm:$0xf]
      %v661 = vld [vmem:[%s622 + $0x14] sm:$0xf]
      %v662 = vunpack.c.l.bf16 %v656
      %v663 = vunpack.c.l.bf16 %v657
      %v664 = vunpack.c.l.bf16 %v658
      %v665 = vunpack.c.l.bf16 %v659
      %v666 = vunpack.c.l.bf16 %v660
      %v667 = vunpack.c.l.bf16 %v661
      %v668 = vld [vmem:[%s9] sm:$0xf]
      %670 = vset.pattern.permute.xlu0 0
      %671 = vperm.xlu0 %670, %v668
      %v672 = vpop.permute.xlu0 %671
      %vm674 = vcmask 392192
      %v676 = vsel %vm674, %v655, 0
      %678 = vmatpush.msra.mxu0 0.0
      %679 = vmatpush.msra.mxu0 0.0
      %680 = vmatpush.msra.mxu0 0.0
      %681 = vmatpush.msra.mxu0 0.0
      %682 = vmatpush.msra.mxu0 0.0
      %683 = vmatpush.msra.mxu0 0.0
      %684 = vmatpush.msra.mxu0 0.0
      %685 = vmatpush.msra.mxu0 0.0
      %686 = vmatpush.msra.mxu0 0.0
      %687 = vmatpush.msra.mxu0 0.0
      %688 = vmatpush.msra.mxu0 %v667
      %689 = vmatpush.msra.mxu0 %v666
      %690 = vmatpush.msra.mxu0 %v665
      %691 = vmatpush.msra.mxu0 %v664
      %692 = vmatpush.msra.mxu0 %v663
      %693 = vmatpush.msra.mxu0 %v662
      %694 = vmatmul.f32.gmra.mxu0 %v676
      %v695 = vpop.f32.mrf.mxu0
      %v696 = vadd.f32 %v672, %v695
      %697 = vdwg.mxu0
      %v698 = vxor.u32 %v696, 2147483648
      %v699 = vmul.f32 %v698, 1.442695
      %v700 = vpow.pop %v699
      %v701 = vadd.f32 %v700, 1.0
      %v702 = vrcp.pop %v701
      %v703 = vmul.f32 %v701, %v702
      %v704 = vsub.f32 1.0, %v703
      %v705 = vmul.f32 %v702, %v704
      %v706 = vadd.f32 %v702, %v705
      %vm707 = vweird.f32 %v701
      %vm708 = vweird.f32 %v702
      %vm709 = vmor %vm707, %vm708
      %v710 = vsel %vm709, %v702, %v706
      %v711 = vand.u32 2147483647, %v701
      %vm712 = vcmp.eq.f32.partialorder %v711, 8.507059e+37
      %v713 = vand.u32 %v701, 2147483648
      %v714 = vor.u32 1.1754944e-38, %v713
      %v715 = vsel %vm712, %v714, %v710
      %v716 = vmul.f32 1.0, %v715
      %v717 = vmul.f32 %v696, %v716
      %v718 = vmul.f32 %v717, 0.03
      %v719 = vadd.f32 %v654, %v718
      %s720 = smul.u32 %s31, 128
      %v721 = vlaneseq
      %v722 = vand.u32 %v721, 127
      %v723 = vstv %s720
      %v724 = vadd.s32 %v723, %v722
      %vm725 = vcmp.lt.s32.totalorder %v724, 0
      %v726 = vsub.s32 0, %v724
      %v727 = vsel %vm725, %v726, %v724
      %v728 = vshrl.u32 %v727, 4
      %v729 = vand.u32 %v727, 15
      %v730 = vsub.s32 0, %v729
      %v731 = vsel %vm725, %v730, %v729
      %vm732 = vcmp.ne.s32.totalorder %v731, 0
      %vm733 = vcmp.lt.s32.totalorder %v731, 0
      %vm734 = vmand %vm733, %vm732
      %v735 = vadd.s32 %v731, 16
      %v736 = vsel %vm734, %v735, %v731
      %v737 = vlaneseq
      %v738 = vshrl.u32 %v737, 7
      %v739 = vadd.s32 %v738, 8
      %vm740 = vcmp.eq.s32.totalorder %v736, %v738
      %vm741 = vcmp.eq.s32.totalorder %v736, %v739
      %v742 = vsel %vm740, 1, 0
      %v743 = vsel %vm741, 1, 0
      %v744 = vcvt.s32.f32 %v742
      %v745 = vcvt.s32.f32 %v743
      %v746 = vld [vmem:[%s630] sm:$0xf]
      %v747 = vld [vmem:[%s10] sm:$0xf]
      %vm748 = vcmask 31744
      %v750 = vsel %vm748, %v747, 0
      %vm752 = vcmask 1043456
      %v754 = vsel %vm752, %v654, 0
      %756 = vmatpush.msra.mxu0 0.0
      %757 = vmatpush.msra.mxu0 0.0
      %758 = vmatpush.msra.mxu0 0.0
      %759 = vmatpush.msra.mxu0 0.0
      %760 = vmatpush.msra.mxu0 0.0
      %761 = vmatpush.msra.mxu0 0.0
      %762 = vmatpush.msra.mxu0 0.0
      %763 = vmatpush.msra.mxu0 0.0
      %764 = vmatpush.msra.mxu0 0.0
      %765 = vmatpush.msra.mxu0 0.0
      %766 = vmatpush.msra.mxu0 0.0
      %767 = vmatpush.msra.mxu0 0.0
      %768 = vmatpush.msra.mxu0 0.0
      %769 = vmatpush.msra.mxu0 0.0
      %770 = vmatpush.msra.mxu0 0.0
      %771 = vmatpush.msra.mxu0 %v754
      %772 = vmatmul.f32.gmra.mxu0 %v750
      %v773 = vpop.f32.mrf.mxu0
      %v774 = vadd.f32 0.0, %v773
      %775 = vdwg.mxu0
      %vm776 = vcmask 130048
      %v778 = vsel %vm776, %v746, 0
      %780 = vmatpush.msra.mxu0 0.0
      %781 = vmatpush.msra.mxu0 0.0
      %782 = vmatpush.msra.mxu0 0.0
      %783 = vmatpush.msra.mxu0 0.0
      %784 = vmatpush.msra.mxu0 0.0
      %785 = vmatpush.msra.mxu0 0.0
      %786 = vmatpush.msra.mxu0 0.0
      %787 = vmatpush.msra.mxu0 0.0
      %788 = vmatpush.msra.mxu0 0.0
      %789 = vmatpush.msra.mxu0 0.0
      %790 = vmatpush.msra.mxu0 0.0
      %791 = vmatpush.msra.mxu0 0.0
      %792 = vmatpush.msra.mxu0 0.0
      %793 = vmatpush.msra.mxu0 0.0
      %794 = vmatpush.msra.mxu0 %v745
      %795 = vmatpush.msra.mxu0 %v744
      %796 = vmatmul.f32.gmra.mxu0 %v778
      %v797 = vpop.f32.mrf.mxu0
      %v798 = vadd.f32 %v774, %v797
      %799 = vdwg.mxu0
      %v800 = vxor.u32 %v798, 2147483648
      %v801 = vmul.f32 %v800, 1.442695
      %v802 = vpow.pop %v801
      %v803 = vadd.f32 %v802, 1.0
      %v804 = vrcp.pop %v803
      %v805 = vmul.f32 %v803, %v804
      %v806 = vsub.f32 1.0, %v805
      %v807 = vmul.f32 %v804, %v806
      %v808 = vadd.f32 %v804, %v807
      %vm809 = vweird.f32 %v803
      %vm810 = vweird.f32 %v804
      %vm811 = vmor %vm809, %vm810
      %v812 = vsel %vm811, %v804, %v808
      %v813 = vand.u32 2147483647, %v803
      %vm814 = vcmp.eq.f32.partialorder %v813, 8.507059e+37
      %v815 = vand.u32 %v803, 2147483648
      %v816 = vor.u32 1.1754944e-38, %v815
      %v817 = vsel %vm814, %v816, %v812
      %v818 = vmul.f32 1.0, %v817
      %v819 = vmul.f32 %v798, %v818
      %v820 = vld [vmem:[%s634] sm:$0xf]
      %v821 = vld [vmem:[%s11] sm:$0xf]
      %v823 = vsel %vm748, %v821, 0
      %825 = vmatpush.msra.mxu0 0.0
      %826 = vmatpush.msra.mxu0 0.0
      %827 = vmatpush.msra.mxu0 0.0
      %828 = vmatpush.msra.mxu0 0.0
      %829 = vmatpush.msra.mxu0 0.0
      %830 = vmatpush.msra.mxu0 0.0
      %831 = vmatpush.msra.mxu0 0.0
      %832 = vmatpush.msra.mxu0 0.0
      %833 = vmatpush.msra.mxu0 0.0
      %834 = vmatpush.msra.mxu0 0.0
      %835 = vmatpush.msra.mxu0 0.0
      %836 = vmatpush.msra.mxu0 0.0
      %837 = vmatpush.msra.mxu0 0.0
      %838 = vmatpush.msra.mxu0 0.0
      %839 = vmatpush.msra.mxu0 0.0
      %840 = vmatpush.msra.mxu0 %v754
      %841 = vmatmul.f32.gmra.mxu0 %v823
      %v842 = vpop.f32.mrf.mxu0
      %v843 = vadd.f32 0.0, %v842
      %844 = vdwg.mxu0
      %v846 = vsel %vm776, %v820, 0
      %848 = vmatpush.msra.mxu0 0.0
      %849 = vmatpush.msra.mxu0 0.0
      %850 = vmatpush.msra.mxu0 0.0
      %851 = vmatpush.msra.mxu0 0.0
      %852 = vmatpush.msra.mxu0 0.0
      %853 = vmatpush.msra.mxu0 0.0
      %854 = vmatpush.msra.mxu0 0.0
      %855 = vmatpush.msra.mxu0 0.0
      %856 = vmatpush.msra.mxu0 0.0
      %857 = vmatpush.msra.mxu0 0.0
      %858 = vmatpush.msra.mxu0 0.0
      %859 = vmatpush.msra.mxu0 0.0
      %860 = vmatpush.msra.mxu0 0.0
      %861 = vmatpush.msra.mxu0 0.0
      %862 = vmatpush.msra.mxu0 %v745
      %863 = vmatpush.msra.mxu0 %v744
      %864 = vmatmul.f32.gmra.mxu0 %v846
      %v865 = vpop.f32.mrf.mxu0
      %v866 = vadd.f32 %v843, %v865
      %867 = vdwg.mxu0
      %v868 = vxor.u32 %v866, 2147483648
      %v869 = vmul.f32 %v868, 1.442695
      %v870 = vpow.pop %v869
      %v871 = vadd.f32 %v870, 1.0
      %v872 = vrcp.pop %v871
      %v873 = vmul.f32 %v871, %v872
      %v874 = vsub.f32 1.0, %v873
      %v875 = vmul.f32 %v872, %v874
      %v876 = vadd.f32 %v872, %v875
      %vm877 = vweird.f32 %v871
      %vm878 = vweird.f32 %v872
      %vm879 = vmor %vm877, %vm878
      %v880 = vsel %vm879, %v872, %v876
      %v881 = vand.u32 2147483647, %v871
      %vm882 = vcmp.eq.f32.partialorder %v881, 8.507059e+37
      %v883 = vand.u32 %v871, 2147483648
      %v884 = vor.u32 1.1754944e-38, %v883
      %v885 = vsel %vm882, %v884, %v880
      %v886 = vmul.f32 1.0, %v885
      %v887 = vmul.f32 %v866, %v886
      %v888 = vld [vmem:[%s626] sm:$0xf]
      %890 = vset.pattern.permute.xlu0 0
      %891 = vperm.xlu0 %890, %v888
      %v892 = vpop.permute.xlu0 %891
      %v894 = vadd.f32 %v719, %v892
      %v895 = vadd.f32 %v894, %v819
      %v896 = vld [vmem:[%s638] sm:$0xff]
      %v897 = vld [vmem:[%s642] sm:$0xff]
      %899 = vset.pattern.permute.xlu0 0
      %900 = vperm.xlu0 %899, %v897
      %v901 = vpop.permute.xlu0 %900
      %v904 = vsel %vm748, %v896, 0
      %v907 = vsel %vm752, %v895, 0
      %909 = vmatpush.msra.mxu0 0.0
      %910 = vmatpush.msra.mxu0 0.0
      %911 = vmatpush.msra.mxu0 0.0
      %912 = vmatpush.msra.mxu0 0.0
      %913 = vmatpush.msra.mxu0 0.0
      %914 = vmatpush.msra.mxu0 0.0
      %915 = vmatpush.msra.mxu0 0.0
      %916 = vmatpush.msra.mxu0 0.0
      %917 = vmatpush.msra.mxu0 0.0
      %918 = vmatpush.msra.mxu0 0.0
      %919 = vmatpush.msra.mxu0 0.0
      %920 = vmatpush.msra.mxu0 0.0
      %921 = vmatpush.msra.mxu0 0.0
      %922 = vmatpush.msra.mxu0 0.0
      %923 = vmatpush.msra.mxu0 0.0
      %924 = vmatpush.msra.mxu0 %v907
      %925 = vmatmul.f32.gmra.mxu0 %v904
      %v926 = vpop.f32.mrf.mxu0
      %v927 = vadd.f32 %v901, %v926
      %928 = vdwg.mxu0
      %v929 = vrot.slane %v927, 4
      %v930 = vmax.f32 %v927, %v929
      %v931 = vrot.slane %v930, 2
      %v932 = vmax.f32 %v930, %v931
      %v933 = vrot.slane %v932, 1
      %v934 = vmax.f32 %v932, %v933
      %v935 = vsub.f32 %v927, %v934
      %v936 = vmul.f32 %v935, 1.442695
      %v937 = vpow.pop %v936
      %v938 = vrot.slane %v937, 4
      %v939 = vadd.f32 %v937, %v938
      %v940 = vrot.slane %v939, 2
      %v941 = vadd.f32 %v939, %v940
      %v942 = vrot.slane %v941, 1
      %v943 = vadd.f32 %v941, %v942
      %v944 = vld [vmem:[%s646] sm:$0xf]
      %vm945 = vcmask 64512
      %v947 = vsel %vm945, %v944, 0
      %949 = vmatpush.msra.mxu0 0.0
      %950 = vmatpush.msra.mxu0 0.0
      %951 = vmatpush.msra.mxu0 0.0
      %952 = vmatpush.msra.mxu0 0.0
      %953 = vmatpush.msra.mxu0 0.0
      %954 = vmatpush.msra.mxu0 0.0
      %955 = vmatpush.msra.mxu0 0.0
      %956 = vmatpush.msra.mxu0 0.0
      %957 = vmatpush.msra.mxu0 0.0
      %958 = vmatpush.msra.mxu0 0.0
      %959 = vmatpush.msra.mxu0 0.0
      %960 = vmatpush.msra.mxu0 0.0
      %961 = vmatpush.msra.mxu0 0.0
      %962 = vmatpush.msra.mxu0 0.0
      %963 = vmatpush.msra.mxu0 0.0
      %964 = vmatpush.msra.mxu0 %v937
      %965 = vmatmul.f32.gmra.mxu0 %v947
      %v966 = vpop.f32.mrf.mxu0
      %v967 = vadd.f32 0.0, %v966
      %968 = vdwg.mxu0
      %v969 = vrcp.pop %v943
      %v970 = vmul.f32 %v943, %v969
      %v971 = vsub.f32 1.0, %v970
      %v972 = vmul.f32 %v969, %v971
      %v973 = vadd.f32 %v969, %v972
      %vm974 = vweird.f32 %v943
      %vm975 = vweird.f32 %v969
      %vm976 = vmor %vm974, %vm975
      %v977 = vsel %vm976, %v969, %v973
      %v978 = vand.u32 2147483647, %v943
      %vm979 = vcmp.eq.f32.partialorder %v978, 8.507059e+37
      %v980 = vand.u32 %v943, 2147483648
      %v981 = vor.u32 1.1754944e-38, %v980
      %v982 = vsel %vm979, %v981, %v977
      %v983 = vmul.f32 %v967, %v982
      %v984 = vld [vmem:[%s12] sm:$0xf]
      %986 = vset.pattern.permute.xlu0 0
      %987 = vperm.xlu0 %986, %v984
      %v988 = vpop.permute.xlu0 %987
      %v990 = vadd.f32 %v983, %v988
      %v991 = vadd.f32 %v895, %v990
      %v992 = vadd.f32 %v991, %v887
      %v993 = vld [vmem:[%s13] sm:$0xf]
      %v994 = vld [vmem:[%s14] sm:$0xf]
      %996 = vset.pattern.permute.xlu0 0
      %997 = vperm.xlu0 %996, %v994
      %v998 = vpop.permute.xlu0 %997
      %v1001 = vsel %vm748, %v993, 0
      %v1004 = vsel %vm752, %v992, 0
      %1006 = vmatpush.msra.mxu0 0.0
      %1007 = vmatpush.msra.mxu0 0.0
      %1008 = vmatpush.msra.mxu0 0.0
      %1009 = vmatpush.msra.mxu0 0.0
      %1010 = vmatpush.msra.mxu0 0.0
      %1011 = vmatpush.msra.mxu0 0.0
      %1012 = vmatpush.msra.mxu0 0.0
      %1013 = vmatpush.msra.mxu0 0.0
      %1014 = vmatpush.msra.mxu0 0.0
      %1015 = vmatpush.msra.mxu0 0.0
      %1016 = vmatpush.msra.mxu0 0.0
      %1017 = vmatpush.msra.mxu0 0.0
      %1018 = vmatpush.msra.mxu0 0.0
      %1019 = vmatpush.msra.mxu0 0.0
      %1020 = vmatpush.msra.mxu0 0.0
      %1021 = vmatpush.msra.mxu0 %v1004
      %1022 = vmatmul.f32.gmra.mxu0 %v1001
      %v1023 = vpop.f32.mrf.mxu0
      %v1024 = vadd.f32 %v998, %v1023
      %1025 = vdwg.mxu0
      %1026 = vst [vmem:[%s653] sm:$0xf] %v1024
      %p1027 = scmp.lt.s32.totalorder %s30, 1
      %s1028 = scalar_select %p1027, %s30, 1
      %p1029 = scmp.lt.s32.totalorder %s31, 0
      %s1030 = scalar_select %p1029, %s31, 0
      %s1031 = sadd.s32 %s1030, %s1028
      %s1032 = smul.addr %s1031, 4
      %s1033 = scalar_lea.vmem %s15, %s1032
      // Predicated region
      $region81: #{motion_control_forward.3} parent=79 // pred_check
        %p1034 = pneg %p417
      $region82: #{motion_control_forward.3} parent=79 // pred_check_branch
        %1036 = sbr.rel (%p1034) target = $region84
      $region83: #{motion_control_forward.3} parent=79 // pred_region
        _
      $region84: #{motion_control_forward.3} parent=79 // pred_fallthru
        _
    $region80: #{motion_control_forward.3} parent=5 // pred_fallthru
      _
    %p1037 = scmp.le.s32.totalorder 2, %s21
    // Predicated region
    $region85: #{motion_control_forward.3} parent=5 // pred_check
      %p1038 = pneg %p1037
    $region86: #{motion_control_forward.3} parent=5 // pred_check_branch
      %1040 = sbr.rel (%p1038) target = $region88
    $region87: #{motion_control_forward.3} parent=5 // pred_region
      %s1041 = ssub.s32 %s21, 2
      // Predicated region
      $region89: #{motion_control_forward.3} parent=87 // pred_check
        %p1042 = pneg %p423
      $region90: #{motion_control_forward.3} parent=87 // pred_check_branch
        %1044 = sbr.rel (%p1042) target = $region92
      $region91: #{motion_control_forward.3} parent=87 // pred_region
        %p1045 = scmp.lt.s32.totalorder %s32, 1
        %s1046 = scalar_select %p1045, %s32, 1
        %p1047 = scmp.lt.s32.totalorder %s33, 0
        %s1048 = scalar_select %p1047, %s33, 0
        %s1049 = sadd.s32 %s1048, %s1046
        %s1050 = smul.addr %s1049, 4
        %s1051 = scalar_lea.vmem %s15, %s1050
      $region92: #{motion_control_forward.3} parent=87 // pred_fallthru
        _
    $region88: #{motion_control_forward.3} parent=5 // pred_fallthru
      _
  $region6: #{motion_control_forward.3} parent=0 // loop_footer
    %s25 = sadd.s32 1, %s21
  $region7: #{motion_control_forward.3} parent=0 // loop_footer_branch
    %20 = sbr.rel target = $region3
  $region8: #{motion_control_forward.3} parent=0 // loop_exit
    _

</llo_original>
